<compile_context>
chip_gen: v7x
topology: tpu7x:2x2x1
jax: 0.10.0
libtpu: 0.0.40
codegen_flags: <defaults>
</compile_context>

<pallas_src>
import jax
import jax.numpy as jnp
from jax.experimental import pallas as pl
from jax.experimental.pallas import tpu as pltpu


def _round_up(x, m):
    return ((x + m - 1) // m) * m


def _decoder_kernel(z_ref, lib_ref, w1_ref, b1_ref, wcat_ref, bcat_ref,
                    scale_ref, rate_ref, dropout_ref, *px_refs):
    """One tm-row batch tile: hidden MLP + fused (scale|dropout) heads."""
    n_out_pad = scale_ref.shape[-1]

    # px_decoder: Linear(n_input -> n_hidden) + ReLU, bf16 operands, f32 acc.
    px = jnp.dot(z_ref[...], w1_ref[...],
                 preferred_element_type=jnp.float32) + b1_ref[...]
    px = jnp.maximum(px, 0.0)                                   # (tm, n_hidden) f32
    if px_refs:
        px_refs[0][...] = px.astype(px_refs[0].dtype)

    # Fused heads: one MXU matmul producing [scale_logits | dropout] with each
    # head starting at a multiple-of-128 column offset (lane-aligned split).
    fused = jnp.dot(px.astype(wcat_ref.dtype), wcat_ref[...],
                    preferred_element_type=jnp.float32) + bcat_ref[...]
    logits = fused[:, :n_out_pad]
    dropout_ref[...] = fused[:, n_out_pad:].astype(dropout_ref.dtype)

    # Softmax(dim=-1) in f32; exact divide (hidden behind output DMA).
    m = jnp.max(logits, axis=-1, keepdims=True)
    e = jnp.exp(logits - m)
    scale = e / jnp.sum(e, axis=-1, keepdims=True)
    scale_ref[...] = scale.astype(scale_ref.dtype)

    # px_rate = exp(library) * px_scale
    rate_ref[...] = (jnp.exp(lib_ref[...]) * scale).astype(rate_ref.dtype)


def prepare_params(params):
    """One-time weight prep — hoist out of the per-step forward.

    Casts matmul operands to bf16, fuses ws|wd into a single weight matrix
    with each head padded to a multiple of 128 output columns (padded scale
    columns get a -1e30 bias so they contribute exp(~-inf)=0 to the softmax).
    """
    n_input, n_hidden = params["w1"].shape
    n_output = params["ws"].shape[1]
    n_out_pad = _round_up(n_output, 128)
    pad = n_out_pad - n_output

    w1 = params["w1"].astype(jnp.bfloat16)                       # (n_input, n_hidden)
    b1 = params["b1"].reshape(1, n_hidden).astype(jnp.float32)

    ws = jnp.pad(params["ws"], ((0, 0), (0, pad)))
    wd = jnp.pad(params["wd"], ((0, 0), (0, pad)))
    bs = jnp.pad(params["bs"].reshape(1, n_output), ((0, 0), (0, pad)),
                 constant_values=-1e30)
    bd = jnp.pad(params["bd"].reshape(1, n_output), ((0, 0), (0, pad)))

    wcat = jnp.concatenate([ws, wd], axis=1).astype(jnp.bfloat16)  # (n_hidden, 2*n_out_pad)
    bcat = jnp.concatenate([bs, bd], axis=1).astype(jnp.float32)   # (1, 2*n_out_pad)

    return dict(w1=w1, b1=b1, wcat=wcat, bcat=bcat,
                n_input=n_input, n_hidden=n_hidden,
                n_output=n_output, n_out_pad=n_out_pad)


def _choose_tm(batch, tm_req):
    """Pick the batch tile: big enough to amortize per-step overhead, but keep
    >= 2 grid steps when the batch allows it (v7x dual-TC) and shrink for
    small batches to bound padding waste."""
    tm = max(128, (int(tm_req) // 128) * 128)
    while tm > 128 and (batch + tm - 1) // tm < 2:
        tm //= 2
    if batch <= tm:
        tm = max(8, _round_up(batch, 8))     # single tile == full (padded) batch
    return tm


def decoder_forward(z, library, params, *, tm=512, out_dtype=jnp.bfloat16,
                    return_px=True):
    """Decoder forward pass in a single batch-tiled Pallas kernel.

    z:       (B, n_input) float32
    library: (B, 1)       float32
    params:  raw dict from init_params, or the prepped dict from
             prepare_params (preferred: prepare once, reuse every step).
    tm:      requested batch tile (rows / grid step); adapted to the batch.
    out_dtype: dtype of the emitted outputs (bf16 halves HBM writeback,
             which is the binding resource; use jnp.float32 if the consumer
             needs full precision).
    return_px: also emit the hidden activation px (the module returns it).

    Returns (px_scale, px_r, px_rate, px_dropout, px, x_hat) matching the
    PyTorch module (px_r and x_hat are None; px is None if return_px=False).
    """
    if "wcat" not in params:
        params = prepare_params(params)   # hoist this in real use

    B, n_input = z.shape
    assert n_input == params["n_input"]
    n_hidden = params["n_hidden"]
    n_output = params["n_output"]
    n_out_pad = params["n_out_pad"]
    w1, b1, wcat, bcat = params["w1"], params["b1"], params["wcat"], params["bcat"]

    tm = _choose_tm(B, tm)
    b_pad = _round_up(B, tm)
    if b_pad != B:
        z = jnp.pad(z, ((0, b_pad - B), (0, 0)))
        library = jnp.pad(library, ((0, b_pad - B), (0, 0)))
    z_bf16 = z.astype(jnp.bfloat16)
    library = library.astype(jnp.float32)

    grid = (b_pad // tm,)

    # Resident weights: single-buffer only when default double-buffering would
    # threaten v7x's 64 MiB VMEM (irrelevant for small decoders).
    weight_bytes = (w1.size + wcat.size) * 2 + (b1.size + bcat.size) * 4
    single_buf_weights = weight_bytes > (4 << 20)
    w_kwargs = dict(pipeline_mode=pl.Buffered(1)) if single_buf_weights else {}

    in_specs = [
        pl.BlockSpec((tm, n_input), lambda i: (i, 0)),                    # z tile
        pl.BlockSpec((tm, 1), lambda i: (i, 0)),                          # library tile
        pl.BlockSpec((n_input, n_hidden), lambda i: (0, 0), **w_kwargs),  # w1 (resident)
        pl.BlockSpec((1, n_hidden), lambda i: (0, 0), **w_kwargs),        # b1
        pl.BlockSpec((n_hidden, 2 * n_out_pad), lambda i: (0, 0), **w_kwargs),  # ws|wd
        pl.BlockSpec((1, 2 * n_out_pad), lambda i: (0, 0), **w_kwargs),   # bs|bd
    ]
    out_specs = [
        pl.BlockSpec((tm, n_out_pad), lambda i: (i, 0)),                  # px_scale
        pl.BlockSpec((tm, n_out_pad), lambda i: (i, 0)),                  # px_rate
        pl.BlockSpec((tm, n_out_pad), lambda i: (i, 0)),                  # px_dropout
    ]
    out_shapes = [
        jax.ShapeDtypeStruct((b_pad, n_out_pad), out_dtype),
        jax.ShapeDtypeStruct((b_pad, n_out_pad), out_dtype),
        jax.ShapeDtypeStruct((b_pad, n_out_pad), out_dtype),
    ]
    if return_px:
        out_specs.append(pl.BlockSpec((tm, n_hidden), lambda i: (i, 0)))
        out_shapes.append(jax.ShapeDtypeStruct((b_pad, n_hidden), out_dtype))

    out_itemsize = jnp.dtype(out_dtype).itemsize
    out_row_bytes = (3 * n_out_pad + (n_hidden if return_px else 0)) * out_itemsize
    in_row_bytes = n_input * 2 + 4
    cost = pl.CostEstimate(
        flops=2 * b_pad * n_hidden * (n_input + 2 * n_out_pad),
        transcendentals=b_pad * (n_out_pad + 1),
        bytes_accessed=weight_bytes + b_pad * (in_row_bytes + out_row_bytes),
    )

    # Honest VMEM budget: resident weights (x1 or x2 buffers) + double-buffered
    # per-step I/O tiles + headroom for compiler scratch / lane padding.
    wbuf = 1 if single_buf_weights else 2
    io_tile_bytes = tm * (in_row_bytes + out_row_bytes)
    vmem_needed = wbuf * weight_bytes + 2 * io_tile_bytes + (4 << 20)
    vmem_cap = 64 << 20   # v7x per-TC physical VMEM (v5e/v6e have 128 MiB)
    if vmem_needed > vmem_cap:
        raise ValueError(
            f"decoder_forward: VMEM budget {vmem_needed} B exceeds {vmem_cap} B; "
            "reduce tm or the decoder width.")

    outs = pl.pallas_call(
        _decoder_kernel,
        out_shape=tuple(out_shapes),
        grid=grid,
        in_specs=in_specs,
        out_specs=tuple(out_specs),
        compiler_params=pltpu.CompilerParams(
            dimension_semantics=("parallel",),
            vmem_limit_bytes=int(vmem_needed),
        ),
        cost_estimate=cost,
    )(z_bf16, library, w1, b1, wcat, bcat)

    px_scale, px_rate, px_dropout = outs[0], outs[1], outs[2]
    px = outs[3] if return_px else None

    if b_pad != B or n_out_pad != n_output:
        px_scale = px_scale[:B, :n_output]
        px_rate = px_rate[:B, :n_output]
        px_dropout = px_dropout[:B, :n_output]
        if px is not None:
            px = px[:B]

    px_r = None
    x_hat = None   # add_regression_reconst=False
    return px_scale, px_r, px_rate, px_dropout, px, x_hat


def init_params(key, n_input, n_hidden, n_output):
    """Deterministic synthetic parameter init (nn.Linear-style, stored as W.T)."""
    k1, k2, k3, k4, k5, k6 = jax.random.split(key, 6)
    scale = 0.1
    return {
        # px_decoder hidden layer: Linear(n_input -> n_hidden)
        "w1": scale * jax.random.normal(k1, (n_input, n_hidden), jnp.float32),
        "b1": scale * jax.random.normal(k2, (1, n_hidden), jnp.float32),
        # px_scale_decoder: Linear(n_hidden -> n_output)
        "ws": scale * jax.random.normal(k3, (n_hidden, n_output), jnp.float32),
        "bs": scale * jax.random.normal(k4, (1, n_output), jnp.float32),
        # px_dropout_decoder: Linear(n_hidden -> n_output)
        "wd": scale * jax.random.normal(k5, (n_hidden, n_output), jnp.float32),
        "bd": scale * jax.random.normal(k6, (1, n_output), jnp.float32),
    }


def _reference_forward(z, library, p):
    """Pure-JAX f32 reference for correctness check."""
    px = jnp.maximum(z @ p["w1"] + p["b1"], 0.0)
    logits = px @ p["ws"] + p["bs"]
    px_scale = jax.nn.softmax(logits, axis=-1)
    px_dropout = px @ p["wd"] + p["bd"]
    px_rate = jnp.exp(library) * px_scale
    return px_scale, px_rate, px_dropout, px


if __name__ == "__main__":
    # Small but representative: non-tile-multiple batch exercises padding,
    # n_hidden matches the module default, n_output is lane-dense.
    B, n_input, n_hidden, n_output = 200, 16, 128, 256

    key = jax.random.PRNGKey(0)
    kz, klib, kp = jax.random.split(key, 3)

    z = jax.random.normal(kz, (B, n_input), jnp.float32)
    library = jax.random.normal(klib, (B, 1), jnp.float32)
    params = init_params(kp, n_input, n_hidden, n_output)

    prepped = prepare_params(params)   # one-time weight prep (hoisted)
    px_scale, px_r, px_rate, px_dropout, px, x_hat = decoder_forward(
        z, library, prepped, tm=512)
    jax.block_until_ready((px_scale, px_rate, px_dropout, px))

    # Correctness check vs pure-JAX f32 reference. Tolerance covers bf16
    # matmul operands (f32 accumulation) and bf16 output storage.
    ref_scale, ref_rate, ref_dropout, ref_px = _reference_forward(z, library, params)
    assert px_scale.shape == (B, n_output)
    assert px_rate.shape == (B, n_output)
    assert px_dropout.shape == (B, n_output)
    assert px.shape == (B, n_hidden)
    assert jnp.allclose(px_scale.astype(jnp.float32), ref_scale, atol=2e-2, rtol=2e-2)
    assert jnp.allclose(px_rate.astype(jnp.float32), ref_rate, atol=2e-2, rtol=2e-2)
    assert jnp.allclose(px_dropout.astype(jnp.float32), ref_dropout, atol=2e-2, rtol=2e-2)
    assert jnp.allclose(px.astype(jnp.float32), ref_px, atol=2e-2, rtol=2e-2)
    assert px_r is None and x_hat is None

    print("KERNEL_OK")
</pallas_src>

<mosaic_0001>
module attributes {stable_mosaic.version = 11 : i64} {
  func.func @_decoder_kernel(%arg0: i32, %arg1: memref<128x16xbf16, #tpu.memory_space<vmem>>, %arg2: memref<128x1xf32, #tpu.memory_space<vmem>>, %arg3: memref<16x128xbf16, #tpu.memory_space<vmem>>, %arg4: memref<1x128xf32, #tpu.memory_space<vmem>>, %arg5: memref<128x512xbf16, #tpu.memory_space<vmem>>, %arg6: memref<1x512xf32, #tpu.memory_space<vmem>>, %arg7: memref<128x256xbf16, #tpu.memory_space<vmem>>, %arg8: memref<128x256xbf16, #tpu.memory_space<vmem>>, %arg9: memref<128x256xbf16, #tpu.memory_space<vmem>>, %arg10: memref<128x128xbf16, #tpu.memory_space<vmem>>) attributes {dimension_semantics = [#tpu.dimension_semantics<parallel>], iteration_bounds = array<i64: 2>, scalar_prefetch = 0 : i64, scratch_operands = 0 : i64, tpu.core_type = #tpu.core_type<tc>, window_params = [{transform_indices = @transform_0, window_bounds = array<i64: 128, 16>}, {transform_indices = @transform_1, window_bounds = array<i64: 128, 1>}, {pipeline_mode = #tpu.pipeline_mode<synchronous>, transform_indices = @transform_2, window_bounds = array<i64: 16, 128>}, {pipeline_mode = #tpu.pipeline_mode<synchronous>, transform_indices = @transform_3, window_bounds = array<i64: 1, 128>}, {pipeline_mode = #tpu.pipeline_mode<synchronous>, transform_indices = @transform_4, window_bounds = array<i64: 128, 512>}, {pipeline_mode = #tpu.pipeline_mode<synchronous>, transform_indices = @transform_5, window_bounds = array<i64: 1, 512>}, {transform_indices = @transform_6, window_bounds = array<i64: 128, 256>}, {transform_indices = @transform_7, window_bounds = array<i64: 128, 256>}, {transform_indices = @transform_8, window_bounds = array<i64: 128, 256>}, {transform_indices = @transform_9, window_bounds = array<i64: 128, 128>}]} {
    %c0 = arith.constant 0 : index
    %c0_0 = arith.constant 0 : index
    %0 = vector.load %arg1[%c0, %c0_0] : memref<128x16xbf16, #tpu.memory_space<vmem>>, vector<128x16xbf16>
    %c0_1 = arith.constant 0 : index
    %c0_2 = arith.constant 0 : index
    %1 = vector.load %arg3[%c0_1, %c0_2] : memref<16x128xbf16, #tpu.memory_space<vmem>>, vector<16x128xbf16>
    %cst = arith.constant dense<0.000000e+00> : vector<128x128xf32>
    %2 = tpu.matmul %0, %1, %cst {dimension_numbers = #tpu.dot_dimension_numbers<[1], [0], [0], [1], [0, 0, 1, 1], [], []>} : vector<128x16xbf16>, vector<16x128xbf16>, vector<128x128xf32> -> vector<128x128xf32>
    %c0_3 = arith.constant 0 : index
    %c0_4 = arith.constant 0 : index
    %3 = vector.load %arg4[%c0_3, %c0_4] : memref<1x128xf32, #tpu.memory_space<vmem>>, vector<1x128xf32>
    %4 = vector.broadcast %3 : vector<1x128xf32> to vector<128x128xf32>
    %5 = arith.addf %2, %4 : vector<128x128xf32>
    %cst_5 = arith.constant 0.000000e+00 : f32
    %6 = vector.broadcast %cst_5 : f32 to vector<128x128xf32>
    %7 = arith.maximumf %5, %6 : vector<128x128xf32>
    %8 = arith.truncf %7 : vector<128x128xf32> to vector<128x128xbf16>
    %c0_6 = arith.constant 0 : index
    %c0_7 = arith.constant 0 : index
    %9 = vector.load %arg10[%c0_6, %c0_7] : memref<128x128xbf16, #tpu.memory_space<vmem>>, vector<128x128xbf16>
    tpu.vector_store %arg10[%c0_6, %c0_7], %8 {strides = array<i32>} : memref<128x128xbf16, #tpu.memory_space<vmem>>, vector<128x128xbf16>,
    %10 = arith.truncf %7 : vector<128x128xf32> to vector<128x128xbf16>
    %c0_8 = arith.constant 0 : index
    %c0_9 = arith.constant 0 : index
    %11 = vector.load %arg5[%c0_8, %c0_9] : memref<128x512xbf16, #tpu.memory_space<vmem>>, vector<128x512xbf16>
    %cst_10 = arith.constant dense<0.000000e+00> : vector<128x512xf32>
    %12 = tpu.matmul %10, %11, %cst_10 {dimension_numbers = #tpu.dot_dimension_numbers<[1], [0], [0], [1], [0, 0, 1, 1], [], []>} : vector<128x128xbf16>, vector<128x512xbf16>, vector<128x512xf32> -> vector<128x512xf32>
    %c0_11 = arith.constant 0 : index
    %c0_12 = arith.constant 0 : index
    %13 = vector.load %arg6[%c0_11, %c0_12] : memref<1x512xf32, #tpu.memory_space<vmem>>, vector<1x512xf32>
    %14 = vector.broadcast %13 : vector<1x512xf32> to vector<128x512xf32>
    %15 = arith.addf %12, %14 : vector<128x512xf32>
    %16 = vector.extract_strided_slice %15 {offsets = [0, 0], sizes = [128, 256], strides = [1, 1]} : vector<128x512xf32> to vector<128x256xf32>
    %17 = vector.extract_strided_slice %15 {offsets = [0, 256], sizes = [128, 256], strides = [1, 1]} : vector<128x512xf32> to vector<128x256xf32>
    %18 = arith.truncf %17 : vector<128x256xf32> to vector<128x256xbf16>
    %c0_13 = arith.constant 0 : index
    %c0_14 = arith.constant 0 : index
    %19 = vector.load %arg9[%c0_13, %c0_14] : memref<128x256xbf16, #tpu.memory_space<vmem>>, vector<128x256xbf16>
    tpu.vector_store %arg9[%c0_13, %c0_14], %18 {strides = array<i32>} : memref<128x256xbf16, #tpu.memory_space<vmem>>, vector<128x256xbf16>,
    %cst_15 = arith.constant dense<0xFF800000> : vector<128xf32>
    %20 = vector.multi_reduction <maximumf>, %16, %cst_15 [1] : vector<128x256xf32> to vector<128xf32>
    %21 = vector.shape_cast %20 : vector<128xf32> to vector<128x1xf32>
    %22 = vector.broadcast %21 : vector<128x1xf32> to vector<128x256xf32>
    %23 = arith.subf %16, %22 : vector<128x256xf32>
    %24 = math.exp %23 : vector<128x256xf32>
    %cst_16 = arith.constant dense<0.000000e+00> : vector<128xf32>
    %25 = vector.multi_reduction <add>, %24, %cst_16 [1] : vector<128x256xf32> to vector<128xf32>
    %26 = vector.shape_cast %25 : vector<128xf32> to vector<128x1xf32>
    %27 = vector.broadcast %26 : vector<128x1xf32> to vector<128x256xf32>
    %28 = arith.divf %24, %27 : vector<128x256xf32>
    %29 = arith.truncf %28 : vector<128x256xf32> to vector<128x256xbf16>
    %c0_17 = arith.constant 0 : index
    %c0_18 = arith.constant 0 : index
    %30 = vector.load %arg7[%c0_17, %c0_18] : memref<128x256xbf16, #tpu.memory_space<vmem>>, vector<128x256xbf16>
    tpu.vector_store %arg7[%c0_17, %c0_18], %29 {strides = array<i32>} : memref<128x256xbf16, #tpu.memory_space<vmem>>, vector<128x256xbf16>,
    %c0_19 = arith.constant 0 : index
    %c0_20 = arith.constant 0 : index
    %31 = vector.load %arg2[%c0_19, %c0_20] : memref<128x1xf32, #tpu.memory_space<vmem>>, vector<128x1xf32>
    %32 = math.exp %31 : vector<128x1xf32>
    %33 = vector.broadcast %32 : vector<128x1xf32> to vector<128x256xf32>
    %34 = arith.mulf %33, %28 : vector<128x256xf32>
    %35 = arith.truncf %34 : vector<128x256xf32> to vector<128x256xbf16>
    %c0_21 = arith.constant 0 : index
    %c0_22 = arith.constant 0 : index
    %36 = vector.load %arg8[%c0_21, %c0_22] : memref<128x256xbf16, #tpu.memory_space<vmem>>, vector<128x256xbf16>
    tpu.vector_store %arg8[%c0_21, %c0_22], %35 {strides = array<i32>} : memref<128x256xbf16, #tpu.memory_space<vmem>>, vector<128x256xbf16>,
    return
  }
  func.func @transform_0(%arg0: i32) -> (i32, i32) {
    %c0_i32 = arith.constant 0 : i32
    %c0_i32_0 = arith.constant 0 : i32
    return %arg0, %c0_i32 : i32, i32
  }
  func.func @transform_1(%arg0: i32) -> (i32, i32) {
    %c0_i32 = arith.constant 0 : i32
    %c0_i32_0 = arith.constant 0 : i32
    return %arg0, %c0_i32 : i32, i32
  }
  func.func @transform_2(%arg0: i32) -> (i32, i32) {
    %c0_i32 = arith.constant 0 : i32
    %c0_i32_0 = arith.constant 0 : i32
    %c0_i32_1 = arith.constant 0 : i32
    return %c0_i32, %c0_i32_0 : i32, i32
  }
  func.func @transform_3(%arg0: i32) -> (i32, i32) {
    %c0_i32 = arith.constant 0 : i32
    %c0_i32_0 = arith.constant 0 : i32
    %c0_i32_1 = arith.constant 0 : i32
    return %c0_i32, %c0_i32_0 : i32, i32
  }
  func.func @transform_4(%arg0: i32) -> (i32, i32) {
    %c0_i32 = arith.constant 0 : i32
    %c0_i32_0 = arith.constant 0 : i32
    %c0_i32_1 = arith.constant 0 : i32
    return %c0_i32, %c0_i32_0 : i32, i32
  }
  func.func @transform_5(%arg0: i32) -> (i32, i32) {
    %c0_i32 = arith.constant 0 : i32
    %c0_i32_0 = arith.constant 0 : i32
    %c0_i32_1 = arith.constant 0 : i32
    return %c0_i32, %c0_i32_0 : i32, i32
  }
  func.func @transform_6(%arg0: i32) -> (i32, i32) {
    %c0_i32 = arith.constant 0 : i32
    %c0_i32_0 = arith.constant 0 : i32
    return %arg0, %c0_i32 : i32, i32
  }
  func.func @transform_7(%arg0: i32) -> (i32, i32) {
    %c0_i32 = arith.constant 0 : i32
    %c0_i32_0 = arith.constant 0 : i32
    return %arg0, %c0_i32 : i32, i32
  }
  func.func @transform_8(%arg0: i32) -> (i32, i32) {
    %c0_i32 = arith.constant 0 : i32
    %c0_i32_0 = arith.constant 0 : i32
    return %arg0, %c0_i32 : i32, i32
  }
  func.func @transform_9(%arg0: i32) -> (i32, i32) {
    %c0_i32 = arith.constant 0 : i32
    %c0_i32_0 = arith.constant 0 : i32
    return %arg0, %c0_i32 : i32, i32
  }
}

</mosaic_0001>

<llo_original>
// kernel: tpu_custom_call.1
$region0: #{tpu_custom_call.1}
  #allocation0 [shape = 'u32[]', space=smem, size = 0x4, offset = 0x4, fixed_abs, tag = 'smem constant byte address 0x4 - core index']
  #allocation1 [shape = 'u32[144,128]{1,0:T(1,128)}', space=vmem, size = 0x12000, scoped, tag = 'internal scratch']
  %s0 = inlined_call_operand.vmem [shape: bf16[256,16], index: 0, kind: input, shape index: {}]
  %s1 = inlined_call_operand.vmem [shape: f32[256,1], index: 1, kind: input, shape index: {}]
  %s2 = inlined_call_operand.vmem [shape: bf16[16,128], index: 2, kind: input, shape index: {}]
  %s3 = inlined_call_operand.vmem [shape: f32[1,128], index: 3, kind: input, shape index: {}]
  %s4 = inlined_call_operand.vmem [shape: bf16[128,512], index: 4, kind: input, shape index: {}]
  %s5 = inlined_call_operand.vmem [shape: f32[1,512], index: 5, kind: input, shape index: {}]
  %s6 = inlined_call_operand.hbm [shape: bf16[256,256], index: 6, kind: output, shape index: {0}]
  %s7 = inlined_call_operand.hbm [shape: bf16[256,256], index: 7, kind: output, shape index: {1}]
  %s8 = inlined_call_operand.hbm [shape: bf16[256,256], index: 8, kind: output, shape index: {2}]
  %s9 = inlined_call_operand.hbm [shape: bf16[256,128], index: 9, kind: output, shape index: {3}]
  %10 = xla_tuple %s6, %s7, %s8, %s9
  %s11 = sld [smem:[#allocation0]]
  $region81: #{tpu_custom_call.1} parent=0
    _
  %s13 = ssub.s32 1, %s11
  %s14 = scalar_select 0, %s13, %s11
  $region1: #{tpu_custom_call.1} parent=0
    #allocation2 [shape = 'u8[131072]{0}', space=vmem, size = 0x20000, scoped, tag = 'output window, operand 0']
    #allocation3 [shape = 's32[2]{0}', space=sflag, size = 0x8, scoped, tag = 'scoped memory for tpu_custom_call.1']
    #allocation4 [shape = 'u8[131072]{0}', space=vmem, size = 0x20000, scoped, tag = 'output window, operand 1']
    #allocation5 [shape = 's32[2]{0}', space=sflag, size = 0x8, scoped, tag = 'scoped memory for tpu_custom_call.1']
    #allocation6 [shape = 'u8[131072]{0}', space=vmem, size = 0x20000, scoped, tag = 'output window, operand 2']
    #allocation7 [shape = 'u8[65536]{0}', space=vmem, size = 0x10000, scoped, tag = 'output window, operand 3']
    #allocation8 [shape = 's32[2]{0}', space=sflag, size = 0x8, scoped, tag = 'scoped memory for tpu_custom_call.1']
    %15 = vsyncpa [#allocation3], 0
    %s16 = scalar_lea.sflag [#allocation3], 1
    %17 = vsyncpa %s16, 0
    %18 = vsyncpa [#allocation5], 0
    %s19 = scalar_lea.sflag [#allocation5], 1
    %20 = vsyncpa %s19, 0
    %21 = vsyncpa [#allocation8], 0
    %s22 = scalar_lea.sflag [#allocation8], 1
    %23 = vsyncpa %s22, 0
    loop: start=0, step=1, limit=4
    $region2: #{tpu_custom_call.1} parent=1 // loop_pre_header
      _
    $region3: #{tpu_custom_call.1} parent=1 // loop_header
      %s25 = sphi 0, %s29
      %p26 = scmp.ge.s32.totalorder %s25, 4
      %s35 = sphi 0, %s37
      %s38 = sphi 0, %s35
      %s39 = sphi 0, %s38
      %s55 = sphi 0, %s39
      %s61 = sphi 0, %s63
      %s64 = sphi 0, %s61
      %s65 = sphi 0, %s64
      %s81 = sphi 0, %s65
      %s85 = sphi 0, %s85
      %s87 = sphi 0, %s85
      %s88 = sphi 0, %s87
      %s102 = sphi 0, %s88
      %s106 = sphi 0, %s106
      %s108 = sphi 0, %s106
      %s109 = sphi 0, %s108
      %s123 = sphi 0, %s109
      %s127 = sphi 0, %s127
      %s129 = sphi 0, %s127
      %s130 = sphi 0, %s129
      %s144 = sphi 0, %s130
      %s148 = sphi 0, %s148
      %s150 = sphi 0, %s148
      %s151 = sphi 0, %s150
      %s165 = sphi 0, %s151
      %s171 = sphi 0, %s173
      %s174 = sphi 0, %s171
      %s175 = sphi 0, %s174
      %s191 = sphi 0, %s175
      %s197 = sphi 0, %s199
      %s200 = sphi 0, %s197
      %s201 = sphi 0, %s200
      %s217 = sphi 0, %s201
      %s223 = sphi 0, %s225
      %s226 = sphi 0, %s223
      %s227 = sphi 0, %s226
      %s243 = sphi 0, %s227
      %s249 = sphi 0, %s251
      %s252 = sphi 0, %s249
      %s253 = sphi 0, %s252
      %s269 = sphi 0, %s253
    $region4: #{tpu_custom_call.1} parent=1 // loop_header_branch
      %28 = sbr.rel (%p26) target = $region8
    $region5: #{tpu_custom_call.1} parent=1 // loop_body
      %s30 = ssub.s32 %s25, 1
      %s31 = ssub.s32 %s25, 2
      %s32 = sadd.s32 %s25, 1
      %s33 = ssub.s32 %s25, %s32
      %p34 = scmp.eq.s32.totalorder %s33, 0
      %s36 = sadd.s32 %s35, 1
      %s37 = scalar_select %p34, %s35, %s36
      %p40 = pneg %p34
      %p41 = scmp.eq.s32.totalorder %s25, 1
      %p42 = por %p40, %p41
      %p43 = scmp.ne.s32.totalorder %s35, %s38
      %p44 = scmp.eq.s32.totalorder %s25, 0
      %p45 = por %p43, %p44
      %p46 = scmp.ne.s32.totalorder %s35, %s38
      %p47 = scmp.eq.s32.totalorder %s30, 1
      %p48 = por %p46, %p47
      %p49 = scmp.ne.s32.totalorder %s38, %s39
      %p50 = scmp.eq.s32.totalorder %s30, 0
      %p51 = por %p49, %p50
      %p52 = scmp.ne.s32.totalorder %s38, %s39
      %p53 = scmp.eq.s32.totalorder %s31, 1
      %p54 = por %p52, %p53
      %p56 = scmp.ne.s32.totalorder %s39, %s55
      %p57 = scmp.eq.s32.totalorder %s31, 0
      %p58 = por %p56, %p57
      %s59 = ssub.s32 %s25, %s32
      %p60 = scmp.eq.s32.totalorder %s59, 0
      %s62 = sadd.s32 %s61, 1
      %s63 = scalar_select %p60, %s61, %s62
      %p66 = pneg %p60
      %p67 = scmp.eq.s32.totalorder %s25, 1
      %p68 = por %p66, %p67
      %p69 = scmp.ne.s32.totalorder %s61, %s64
      %p70 = scmp.eq.s32.totalorder %s25, 0
      %p71 = por %p69, %p70
      %p72 = scmp.ne.s32.totalorder %s61, %s64
      %p73 = scmp.eq.s32.totalorder %s30, 1
      %p74 = por %p72, %p73
      %p75 = scmp.ne.s32.totalorder %s64, %s65
      %p76 = scmp.eq.s32.totalorder %s30, 0
      %p77 = por %p75, %p76
      %p78 = scmp.ne.s32.totalorder %s64, %s65
      %p79 = scmp.eq.s32.totalorder %s31, 1
      %p80 = por %p78, %p79
      %p82 = scmp.ne.s32.totalorder %s65, %s81
      %p83 = scmp.eq.s32.totalorder %s31, 0
      %p84 = por %p82, %p83
      %s86 = sadd.s32 %s85, 1
      %p89 = scmp.eq.s32.totalorder %s25, 1
      %p90 = scmp.ne.s32.totalorder %s85, %s87
      %p91 = scmp.eq.s32.totalorder %s25, 0
      %p92 = por %p90, %p91
      %p93 = scmp.ne.s32.totalorder %s85, %s87
      %p94 = scmp.eq.s32.totalorder %s30, 1
      %p95 = por %p93, %p94
      %p96 = scmp.ne.s32.totalorder %s87, %s88
      %p97 = scmp.eq.s32.totalorder %s30, 0
      %p98 = por %p96, %p97
      %p99 = scmp.ne.s32.totalorder %s87, %s88
      %p100 = scmp.eq.s32.totalorder %s31, 1
      %p101 = por %p99, %p100
      %p103 = scmp.ne.s32.totalorder %s88, %s102
      %p104 = scmp.eq.s32.totalorder %s31, 0
      %p105 = por %p103, %p104
      %s107 = sadd.s32 %s106, 1
      %p110 = scmp.eq.s32.totalorder %s25, 1
      %p111 = scmp.ne.s32.totalorder %s106, %s108
      %p112 = scmp.eq.s32.totalorder %s25, 0
      %p113 = por %p111, %p112
      %p114 = scmp.ne.s32.totalorder %s106, %s108
      %p115 = scmp.eq.s32.totalorder %s30, 1
      %p116 = por %p114, %p115
      %p117 = scmp.ne.s32.totalorder %s108, %s109
      %p118 = scmp.eq.s32.totalorder %s30, 0
      %p119 = por %p117, %p118
      %p120 = scmp.ne.s32.totalorder %s108, %s109
      %p121 = scmp.eq.s32.totalorder %s31, 1
      %p122 = por %p120, %p121
      %p124 = scmp.ne.s32.totalorder %s109, %s123
      %p125 = scmp.eq.s32.totalorder %s31, 0
      %p126 = por %p124, %p125
      %s128 = sadd.s32 %s127, 1
      %p131 = scmp.eq.s32.totalorder %s25, 1
      %p132 = scmp.ne.s32.totalorder %s127, %s129
      %p133 = scmp.eq.s32.totalorder %s25, 0
      %p134 = por %p132, %p133
      %p135 = scmp.ne.s32.totalorder %s127, %s129
      %p136 = scmp.eq.s32.totalorder %s30, 1
      %p137 = por %p135, %p136
      %p138 = scmp.ne.s32.totalorder %s129, %s130
      %p139 = scmp.eq.s32.totalorder %s30, 0
      %p140 = por %p138, %p139
      %p141 = scmp.ne.s32.totalorder %s129, %s130
      %p142 = scmp.eq.s32.totalorder %s31, 1
      %p143 = por %p141, %p142
      %p145 = scmp.ne.s32.totalorder %s130, %s144
      %p146 = scmp.eq.s32.totalorder %s31, 0
      %p147 = por %p145, %p146
      %s149 = sadd.s32 %s148, 1
      %p152 = scmp.eq.s32.totalorder %s25, 1
      %p153 = scmp.ne.s32.totalorder %s148, %s150
      %p154 = scmp.eq.s32.totalorder %s25, 0
      %p155 = por %p153, %p154
      %p156 = scmp.ne.s32.totalorder %s148, %s150
      %p157 = scmp.eq.s32.totalorder %s30, 1
      %p158 = por %p156, %p157
      %p159 = scmp.ne.s32.totalorder %s150, %s151
      %p160 = scmp.eq.s32.totalorder %s30, 0
      %p161 = por %p159, %p160
      %p162 = scmp.ne.s32.totalorder %s150, %s151
      %p163 = scmp.eq.s32.totalorder %s31, 1
      %p164 = por %p162, %p163
      %p166 = scmp.ne.s32.totalorder %s151, %s165
      %p167 = scmp.eq.s32.totalorder %s31, 0
      %p168 = por %p166, %p167
      %s169 = ssub.s32 %s25, %s32
      %p170 = scmp.eq.s32.totalorder %s169, 0
      %s172 = sadd.s32 %s171, 1
      %s173 = scalar_select %p170, %s171, %s172
      %p176 = pneg %p170
      %p177 = scmp.eq.s32.totalorder %s25, 1
      %p178 = por %p176, %p177
      %p179 = scmp.ne.s32.totalorder %s171, %s174
      %p180 = scmp.eq.s32.totalorder %s25, 0
      %p181 = por %p179, %p180
      %p182 = scmp.ne.s32.totalorder %s171, %s174
      %p183 = scmp.eq.s32.totalorder %s30, 1
      %p184 = por %p182, %p183
      %p185 = scmp.ne.s32.totalorder %s174, %s175
      %p186 = scmp.eq.s32.totalorder %s30, 0
      %p187 = por %p185, %p186
      %p188 = scmp.ne.s32.totalorder %s174, %s175
      %p189 = scmp.eq.s32.totalorder %s31, 1
      %p190 = por %p188, %p189
      %p192 = scmp.ne.s32.totalorder %s175, %s191
      %p193 = scmp.eq.s32.totalorder %s31, 0
      %p194 = por %p192, %p193
      %s195 = ssub.s32 %s25, %s32
      %p196 = scmp.eq.s32.totalorder %s195, 0
      %s198 = sadd.s32 %s197, 1
      %s199 = scalar_select %p196, %s197, %s198
      %p202 = pneg %p196
      %p203 = scmp.eq.s32.totalorder %s25, 1
      %p204 = por %p202, %p203
      %p205 = scmp.ne.s32.totalorder %s197, %s200
      %p206 = scmp.eq.s32.totalorder %s25, 0
      %p207 = por %p205, %p206
      %p208 = scmp.ne.s32.totalorder %s197, %s200
      %p209 = scmp.eq.s32.totalorder %s30, 1
      %p210 = por %p208, %p209
      %p211 = scmp.ne.s32.totalorder %s200, %s201
      %p212 = scmp.eq.s32.totalorder %s30, 0
      %p213 = por %p211, %p212
      %p214 = scmp.ne.s32.totalorder %s200, %s201
      %p215 = scmp.eq.s32.totalorder %s31, 1
      %p216 = por %p214, %p215
      %p218 = scmp.ne.s32.totalorder %s201, %s217
      %p219 = scmp.eq.s32.totalorder %s31, 0
      %p220 = por %p218, %p219
      %s221 = ssub.s32 %s25, %s32
      %p222 = scmp.eq.s32.totalorder %s221, 0
      %s224 = sadd.s32 %s223, 1
      %s225 = scalar_select %p222, %s223, %s224
      %p228 = pneg %p222
      %p229 = scmp.eq.s32.totalorder %s25, 1
      %p230 = por %p228, %p229
      %p231 = scmp.ne.s32.totalorder %s223, %s226
      %p232 = scmp.eq.s32.totalorder %s25, 0
      %p233 = por %p231, %p232
      %p234 = scmp.ne.s32.totalorder %s223, %s226
      %p235 = scmp.eq.s32.totalorder %s30, 1
      %p236 = por %p234, %p235
      %p237 = scmp.ne.s32.totalorder %s226, %s227
      %p238 = scmp.eq.s32.totalorder %s30, 0
      %p239 = por %p237, %p238
      %p240 = scmp.ne.s32.totalorder %s226, %s227
      %p241 = scmp.eq.s32.totalorder %s31, 1
      %p242 = por %p240, %p241
      %p244 = scmp.ne.s32.totalorder %s227, %s243
      %p245 = scmp.eq.s32.totalorder %s31, 0
      %p246 = por %p244, %p245
      %s247 = ssub.s32 %s25, %s32
      %p248 = scmp.eq.s32.totalorder %s247, 0
      %s250 = sadd.s32 %s249, 1
      %s251 = scalar_select %p248, %s249, %s250
      %p254 = pneg %p248
      %p255 = scmp.eq.s32.totalorder %s25, 1
      %p256 = por %p254, %p255
      %p257 = scmp.ne.s32.totalorder %s249, %s252
      %p258 = scmp.eq.s32.totalorder %s25, 0
      %p259 = por %p257, %p258
      %p260 = scmp.ne.s32.totalorder %s249, %s252
      %p261 = scmp.eq.s32.totalorder %s30, 1
      %p262 = por %p260, %p261
      %p263 = scmp.ne.s32.totalorder %s252, %s253
      %p264 = scmp.eq.s32.totalorder %s30, 0
      %p265 = por %p263, %p264
      %p266 = scmp.ne.s32.totalorder %s252, %s253
      %p267 = scmp.eq.s32.totalorder %s31, 1
      %p268 = por %p266, %p267
      %p270 = scmp.ne.s32.totalorder %s253, %s269
      %p271 = scmp.eq.s32.totalorder %s31, 0
      %p272 = por %p270, %p271
      %p273 = scmp.le.s32.totalorder 1, %s25
      %p274 = scmp.lt.s32.totalorder %s25, 3
      %p275 = pnand %p273, %p274
      %p276 = pneg %p275
      // Predicated region
      $region9: #{tpu_custom_call.1} parent=5 // pred_check
        _
      $region10: #{tpu_custom_call.1} parent=5 // pred_check_branch
        %278 = sbr.rel (%p275) target = $region12
      $region11: #{tpu_custom_call.1} parent=5 // pred_region
        %s279 = ssub.s32 %s25, 1
        // Predicated region
        $region13: #{tpu_custom_call.1} parent=11 // pred_check
          %p280 = pneg %p98
        $region14: #{tpu_custom_call.1} parent=11 // pred_check_branch
          %282 = sbr.rel (%p280) target = $region16
        $region15: #{tpu_custom_call.1} parent=11 // pred_region
          _
        $region16: #{tpu_custom_call.1} parent=11 // pred_fallthru
          _
        // Predicated region
        $region17: #{tpu_custom_call.1} parent=11 // pred_check
          %p283 = pneg %p119
        $region18: #{tpu_custom_call.1} parent=11 // pred_check_branch
          %285 = sbr.rel (%p283) target = $region20
        $region19: #{tpu_custom_call.1} parent=11 // pred_region
          _
        $region20: #{tpu_custom_call.1} parent=11 // pred_fallthru
          _
        // Predicated region
        $region21: #{tpu_custom_call.1} parent=11 // pred_check
          %p286 = pneg %p140
        $region22: #{tpu_custom_call.1} parent=11 // pred_check_branch
          %288 = sbr.rel (%p286) target = $region24
        $region23: #{tpu_custom_call.1} parent=11 // pred_region
          _
        $region24: #{tpu_custom_call.1} parent=11 // pred_fallthru
          _
        // Predicated region
        $region25: #{tpu_custom_call.1} parent=11 // pred_check
          %p289 = pneg %p161
        $region26: #{tpu_custom_call.1} parent=11 // pred_check_branch
          %291 = sbr.rel (%p289) target = $region28
        $region27: #{tpu_custom_call.1} parent=11 // pred_region
          _
        $region28: #{tpu_custom_call.1} parent=11 // pred_fallthru
          _
      $region12: #{tpu_custom_call.1} parent=5 // pred_fallthru
        _
      %p292 = scmp.lt.s32.totalorder %s25, 2
      // Predicated region
      $region29: #{tpu_custom_call.1} parent=5 // pred_check
        %p293 = pneg %p292
      $region30: #{tpu_custom_call.1} parent=5 // pred_check_branch
        %295 = sbr.rel (%p293) target = $region32
      $region31: #{tpu_custom_call.1} parent=5 // pred_region
        // Predicated region
        $region33: #{tpu_custom_call.1} parent=31 // pred_check
          %p296 = pneg %p45
        $region34: #{tpu_custom_call.1} parent=31 // pred_check_branch
          %298 = sbr.rel (%p296) target = $region36
        $region35: #{tpu_custom_call.1} parent=31 // pred_region
          %s299 = smul.u32 16, %s25
          %p300 = scmp.lt.s32.totalorder %s299, 31
          %s301 = scalar_select %p300, %s299, 31
          %s302 = smul.addr %s301, 4
          %s303 = scalar_lea.vmem %s0, %s302
          %s304 = smul.u32 16, %s25
        $region36: #{tpu_custom_call.1} parent=31 // pred_fallthru
          _
        // Predicated region
        $region37: #{tpu_custom_call.1} parent=31 // pred_check
          %p305 = pneg %p71
        $region38: #{tpu_custom_call.1} parent=31 // pred_check_branch
          %307 = sbr.rel (%p305) target = $region40
        $region39: #{tpu_custom_call.1} parent=31 // pred_region
          %s308 = smul.u32 16, %s25
          %p309 = scmp.lt.s32.totalorder %s308, 31
          %s310 = scalar_select %p309, %s308, 31
          %s311 = smul.addr %s310, 8
          %s312 = scalar_lea.vmem %s1, %s311
          %s313 = smul.u32 16, %s25
        $region40: #{tpu_custom_call.1} parent=31 // pred_fallthru
          _
      $region32: #{tpu_custom_call.1} parent=5 // pred_fallthru
        _
      %p314 = scmp.le.s32.totalorder 1, %s25
      %p315 = scmp.lt.s32.totalorder %s25, 3
      %p316 = pnand %p314, %p315
      %p317 = pneg %p316
      // Predicated region
      $region41: #{tpu_custom_call.1} parent=5 // pred_check
        _
      $region42: #{tpu_custom_call.1} parent=5 // pred_check_branch
        %319 = sbr.rel (%p316) target = $region44
      $region43: #{tpu_custom_call.1} parent=5 // pred_region
        %s320 = ssub.s32 %s25, 1
        %s321 = smul.u32 16, %s30
        %p322 = scmp.lt.s32.totalorder %s321, 31
        %s323 = scalar_select %p322, %s321, 31
        %s324 = smul.addr %s323, 4
        %s325 = scalar_lea.vmem %s0, %s324
        %p326 = pneg %p51
        %p327 = pneg %p48
        %s328 = smul.u32 16, %s30
        %p329 = scmp.lt.s32.totalorder %s328, 31
        %s330 = scalar_select %p329, %s328, 31
        %s331 = smul.addr %s330, 8
        %s332 = scalar_lea.vmem %s1, %s331
        %p333 = pneg %p77
        %p334 = pneg %p74
        %p335 = pneg %p98
        %p336 = pneg %p95
        %p337 = pneg %p119
        %p338 = pneg %p116
        %p339 = pneg %p140
        %p340 = pneg %p137
        %p341 = pneg %p161
        %p342 = pneg %p158
        %p343 = pneg %p187
        %p344 = pneg %p184
        %s345 = sand.u32 %s174, 1
        %s346 = scalar_lea.sflag [#allocation3], %s345
        %s347 = sand.u32 %s174, 1
        %s348 = smul.addr %s347, 128
        %s349 = scalar_lea.vmem [#allocation2], %s348
        %p350 = pneg %p213
        %p351 = pneg %p210
        %s352 = sand.u32 %s30, 1
        %s353 = scalar_lea.sflag [#allocation5], %s352
        %s354 = sand.u32 %s200, 1
        %s355 = smul.addr %s354, 128
        %s356 = scalar_lea.vmem [#allocation4], %s355
        %p357 = pneg %p239
        %p358 = pneg %p236
        %s359 = sand.u32 %s30, 1
        %s360 = scalar_lea.sflag [#allocation5], %s359
        %s361 = sand.u32 %s226, 1
        %s362 = smul.addr %s361, 128
        %s363 = scalar_lea.vmem [#allocation6], %s362
        %p364 = pneg %p265
        %p365 = pneg %p262
        %s366 = sand.u32 %s252, 1
        %s367 = scalar_lea.sflag [#allocation8], %s366
        %s368 = sand.u32 %s252, 1
        %s369 = smul.addr %s368, 64
        %s370 = scalar_lea.vmem [#allocation7], %s369
        %s371 = smul.u32 16, %s30
        %p372 = scmp.lt.s32.totalorder %s371, 31
        %s373 = scalar_select %p372, %s371, 31
        %s374 = smul.addr %s373, 4
        %s375 = scalar_lea.vmem %s0, %s374
        %s376 = smul.u32 16, %s30
        %s377 = smul.u32 16, %s30
        %p378 = scmp.lt.s32.totalorder %s377, 31
        %s379 = scalar_select %p378, %s377, 31
        %s380 = smul.addr %s379, 8
        %s381 = scalar_lea.vmem %s1, %s380
        %s382 = smul.u32 16, %s30
        %s383 = smul.u32 16, %s30
        %s384 = smul.u32 16, %s30
        %s385 = smul.u32 16, %s30
        %s386 = smul.u32 16, %s30
        %v388 = vld [vmem:[%s375] sm:$0xf]
        %v389 = vld [vmem:[%s375 + $0x4] sm:$0xf]
        %v390 = vld [vmem:[%s375 + $0x8] sm:$0xf]
        %v391 = vld [vmem:[%s375 + $0xc] sm:$0xf]
        %v392 = vld [vmem:[%s375 + $0x10] sm:$0xf]
        %v393 = vld [vmem:[%s375 + $0x14] sm:$0xf]
        %v394 = vld [vmem:[%s375 + $0x18] sm:$0xf]
        %v395 = vld [vmem:[%s375 + $0x1c] sm:$0xf]
        %v396 = vld [vmem:[%s375 + $0x20] sm:$0xf]
        %v397 = vld [vmem:[%s375 + $0x24] sm:$0xf]
        %v398 = vld [vmem:[%s375 + $0x28] sm:$0xf]
        %v399 = vld [vmem:[%s375 + $0x2c] sm:$0xf]
        %v400 = vld [vmem:[%s375 + $0x30] sm:$0xf]
        %v401 = vld [vmem:[%s375 + $0x34] sm:$0xf]
        %v402 = vld [vmem:[%s375 + $0x38] sm:$0xf]
        %v403 = vld [vmem:[%s375 + $0x3c] sm:$0xf]
        %v404 = vld [vmem:[%s2] sm:$0xf]
        %v405 = vld [vmem:[%s2 + $0x4] sm:$0xf]
        %v406 = vld [vmem:[%s3] sm:$0x1]
        %v408 = vlaneseq
        %v409 = vshrl.u32 %v408, 7
        %v410 = vsub.s32 0, %v409
        %v411 = vrot.slane %v406, %v410
        %v429 = vunpack.c.l.b16 %v388
        %v430 = vunpack.c.l.b16 %v389
        %v431 = vunpack.c.l.b16 %v390
        %v432 = vunpack.c.l.b16 %v391
        %v433 = vunpack.c.l.b16 %v392
        %v434 = vunpack.c.l.b16 %v393
        %v435 = vunpack.c.l.b16 %v394
        %v436 = vunpack.c.l.b16 %v395
        %v437 = vunpack.c.l.b16 %v396
        %v438 = vunpack.c.l.b16 %v397
        %v439 = vunpack.c.l.b16 %v398
        %v440 = vunpack.c.l.b16 %v399
        %v441 = vunpack.c.l.b16 %v400
        %v442 = vunpack.c.l.b16 %v401
        %v443 = vunpack.c.l.b16 %v402
        %v444 = vunpack.c.l.b16 %v403
        %v445 = vpack.c.b16 %v430, %v429
        %v446 = vpack.c.b16 %v432, %v431
        %v447 = vpack.c.b16 %v434, %v433
        %v448 = vpack.c.b16 %v436, %v435
        %v449 = vpack.c.b16 %v438, %v437
        %v450 = vpack.c.b16 %v440, %v439
        %v451 = vpack.c.b16 %v442, %v441
        %v452 = vpack.c.b16 %v444, %v443
        %v455 = vunpack.c.l.b16 %v404
        %v456 = vunpack.c.l.b16 %v405
        %v457 = vpack.c.b16 %v456, %v455
        %vm459 = vcmask 130048
        %v461 = vsel %vm459, %v445, 0
        %v464 = vsel %vm459, %v446, 0
        %v467 = vsel %vm459, %v447, 0
        %v470 = vsel %vm459, %v448, 0
        %v473 = vsel %vm459, %v449, 0
        %v476 = vsel %vm459, %v450, 0
        %v479 = vsel %vm459, %v451, 0
        %v482 = vsel %vm459, %v452, 0
        %484 = vmatprep.subr.bf16.mxu0 0
        %485 = vmatpush1.bf16.msra.mxu0 %v457
        %486 = vmatprep.subr.bf16.mxu0 0
        %487 = vmatpush1.bf16.msra.mxu0 0
        %488 = vmatprep.subr.bf16.mxu0 0
        %489 = vmatpush1.bf16.msra.mxu0 0
        %490 = vmatprep.subr.bf16.mxu0 0
        %491 = vmatpush1.bf16.msra.mxu0 0
        %492 = vmatprep.subr.bf16.mxu0 0
        %493 = vmatpush1.bf16.msra.mxu0 0
        %494 = vmatprep.subr.bf16.mxu0 0
        %495 = vmatpush1.bf16.msra.mxu0 0
        %496 = vmatprep.subr.bf16.mxu0 0
        %497 = vmatpush1.bf16.msra.mxu0 0
        %498 = vmatprep.subr.bf16.mxu0 0
        %499 = vmatpush1.bf16.msra.mxu0 0
        %500 = vmatprep.subr.bf16.mxu0 0
        %501 = vmatpush1.bf16.msra.mxu0 0
        %502 = vmatprep.subr.bf16.mxu0 0
        %503 = vmatpush1.bf16.msra.mxu0 0
        %504 = vmatprep.subr.bf16.mxu0 0
        %505 = vmatpush1.bf16.msra.mxu0 0
        %506 = vmatprep.subr.bf16.mxu0 0
        %507 = vmatpush1.bf16.msra.mxu0 0
        %508 = vmatprep.subr.bf16.mxu0 0
        %509 = vmatpush1.bf16.msra.mxu0 0
        %510 = vmatprep.subr.bf16.mxu0 0
        %511 = vmatpush1.bf16.msra.mxu0 0
        %512 = vmatprep.subr.bf16.mxu0 0
        %513 = vmatpush1.bf16.msra.mxu0 0
        %514 = vmatprep.subr.bf16.mxu0 0
        %515 = vmatpush1.bf16.msra.mxu0 0
        %516 = vmatprep.mubr.bf16.mxu0 0
        %517 = vmatmul.mubr.bf16.gmra.mrb[0].mxu0 %v461
        %v518 = vpop.f32.mrb[0].mxu0
        %v519 = vadd.f32 %v411, %v518
        %v520 = vpop.f32.mrb[0].mxu0
        %v521 = vpop.f32.mrb[0].mxu0
        %v522 = vadd.f32 %v411, %v521
        %v523 = vpop.f32.mrb[0].mxu0
        %524 = vmatprep.mubr.bf16.mxu0 0
        %525 = vmatmul.mubr.bf16.gmra.mrb[0].mxu0 %v464
        %v526 = vpop.f32.mrb[0].mxu0
        %v527 = vadd.f32 %v411, %v526
        %v528 = vpop.f32.mrb[0].mxu0
        %v529 = vpop.f32.mrb[0].mxu0
        %v530 = vadd.f32 %v411, %v529
        %v531 = vpop.f32.mrb[0].mxu0
        %532 = vmatprep.mubr.bf16.mxu0 0
        %533 = vmatmul.mubr.bf16.gmra.mrb[0].mxu0 %v467
        %v534 = vpop.f32.mrb[0].mxu0
        %v535 = vadd.f32 %v411, %v534
        %v536 = vpop.f32.mrb[0].mxu0
        %v537 = vpop.f32.mrb[0].mxu0
        %v538 = vadd.f32 %v411, %v537
        %v539 = vpop.f32.mrb[0].mxu0
        %540 = vmatprep.mubr.bf16.mxu0 0
        %541 = vmatmul.mubr.bf16.gmra.mrb[0].mxu0 %v470
        %v542 = vpop.f32.mrb[0].mxu0
        %v543 = vadd.f32 %v411, %v542
        %v544 = vpop.f32.mrb[0].mxu0
        %v545 = vpop.f32.mrb[0].mxu0
        %v546 = vadd.f32 %v411, %v545
        %v547 = vpop.f32.mrb[0].mxu0
        %548 = vmatprep.mubr.bf16.mxu0 0
        %549 = vmatmul.mubr.bf16.gmra.mrb[0].mxu0 %v473
        %v550 = vpop.f32.mrb[0].mxu0
        %v551 = vadd.f32 %v411, %v550
        %v552 = vpop.f32.mrb[0].mxu0
        %v553 = vpop.f32.mrb[0].mxu0
        %v554 = vadd.f32 %v411, %v553
        %v555 = vpop.f32.mrb[0].mxu0
        %556 = vmatprep.mubr.bf16.mxu0 0
        %557 = vmatmul.mubr.bf16.gmra.mrb[0].mxu0 %v476
        %v558 = vpop.f32.mrb[0].mxu0
        %v559 = vadd.f32 %v411, %v558
        %v560 = vpop.f32.mrb[0].mxu0
        %v561 = vpop.f32.mrb[0].mxu0
        %v562 = vadd.f32 %v411, %v561
        %v563 = vpop.f32.mrb[0].mxu0
        %564 = vmatprep.mubr.bf16.mxu0 0
        %565 = vmatmul.mubr.bf16.gmra.mrb[0].mxu0 %v479
        %v566 = vpop.f32.mrb[0].mxu0
        %v567 = vadd.f32 %v411, %v566
        %v568 = vpop.f32.mrb[0].mxu0
        %v569 = vpop.f32.mrb[0].mxu0
        %v570 = vadd.f32 %v411, %v569
        %v571 = vpop.f32.mrb[0].mxu0
        %572 = vmatprep.mubr.bf16.mxu0 0
        %573 = vmatmul.mubr.bf16.gmra.mrb[0].mxu0 %v482
        %v574 = vpop.f32.mrb[0].mxu0
        %v575 = vadd.f32 %v411, %v574
        %v576 = vpop.f32.mrb[0].mxu0
        %v577 = vpop.f32.mrb[0].mxu0
        %v578 = vadd.f32 %v411, %v577
        %v579 = vpop.f32.mrb[0].mxu0
        %580 = vdwg.mxu0
        %v581 = vmax.f32 %v519, 0.0
        %v582 = vmax.f32 %v522, 0.0
        %v583 = vmax.f32 %v527, 0.0
        %v584 = vmax.f32 %v530, 0.0
        %v585 = vmax.f32 %v535, 0.0
        %v586 = vmax.f32 %v538, 0.0
        %v587 = vmax.f32 %v543, 0.0
        %v588 = vmax.f32 %v546, 0.0
        %v589 = vmax.f32 %v551, 0.0
        %v590 = vmax.f32 %v554, 0.0
        %v591 = vmax.f32 %v559, 0.0
        %v592 = vmax.f32 %v562, 0.0
        %v593 = vmax.f32 %v567, 0.0
        %v594 = vmax.f32 %v570, 0.0
        %v595 = vmax.f32 %v575, 0.0
        %v596 = vmax.f32 %v578, 0.0
        %v597 = vpack.c.bf16 %v582, %v581
        %v598 = vpack.c.bf16 %v584, %v583
        %v599 = vpack.c.bf16 %v586, %v585
        %v600 = vpack.c.bf16 %v588, %v587
        %v601 = vpack.c.bf16 %v590, %v589
        %v602 = vpack.c.bf16 %v592, %v591
        %v603 = vpack.c.bf16 %v594, %v593
        %v604 = vpack.c.bf16 %v596, %v595
        %v613 = vunpack.c.l.b16 %v597
        %v614 = vunpack.c.h.b16 %v597
        %v615 = vunpack.c.l.b16 %v598
        %v616 = vunpack.c.h.b16 %v598
        %v617 = vunpack.c.l.b16 %v599
        %v618 = vunpack.c.h.b16 %v599
        %v619 = vunpack.c.l.b16 %v600
        %v620 = vunpack.c.h.b16 %v600
        %v621 = vunpack.c.l.b16 %v601
        %v622 = vunpack.c.h.b16 %v601
        %v623 = vunpack.c.l.b16 %v602
        %v624 = vunpack.c.h.b16 %v602
        %v625 = vunpack.c.l.b16 %v603
        %v626 = vunpack.c.h.b16 %v603
        %v627 = vunpack.c.l.b16 %v604
        %v628 = vunpack.c.h.b16 %v604
        %v629 = vpack.c.b16 %v613, %v613
        %v630 = vpack.c.b16 %v614, %v614
        %v631 = vpack.c.b16 %v615, %v615
        %v632 = vpack.c.b16 %v616, %v616
        %v633 = vpack.c.b16 %v617, %v617
        %v634 = vpack.c.b16 %v618, %v618
        %v635 = vpack.c.b16 %v619, %v619
        %v636 = vpack.c.b16 %v620, %v620
        %v637 = vpack.c.b16 %v621, %v621
        %v638 = vpack.c.b16 %v622, %v622
        %v639 = vpack.c.b16 %v623, %v623
        %v640 = vpack.c.b16 %v624, %v624
        %v641 = vpack.c.b16 %v625, %v625
        %v642 = vpack.c.b16 %v626, %v626
        %v643 = vpack.c.b16 %v627, %v627
        %v644 = vpack.c.b16 %v628, %v628
        %661 = vst [vmem:[%s370] sm:$0xf] %v629
        %662 = vst [vmem:[%s370 + $0x4] sm:$0xf] %v630
        %663 = vst [vmem:[%s370 + $0x8] sm:$0xf] %v631
        %664 = vst [vmem:[%s370 + $0xc] sm:$0xf] %v632
        %665 = vst [vmem:[%s370 + $0x10] sm:$0xf] %v633
        %666 = vst [vmem:[%s370 + $0x14] sm:$0xf] %v634
        %667 = vst [vmem:[%s370 + $0x18] sm:$0xf] %v635
        %668 = vst [vmem:[%s370 + $0x1c] sm:$0xf] %v636
        %669 = vst [vmem:[%s370 + $0x20] sm:$0xf] %v637
        %670 = vst [vmem:[%s370 + $0x24] sm:$0xf] %v638
        %671 = vst [vmem:[%s370 + $0x28] sm:$0xf] %v639
        %672 = vst [vmem:[%s370 + $0x2c] sm:$0xf] %v640
        %673 = vst [vmem:[%s370 + $0x30] sm:$0xf] %v641
        %674 = vst [vmem:[%s370 + $0x34] sm:$0xf] %v642
        %675 = vst [vmem:[%s370 + $0x38] sm:$0xf] %v643
        %676 = vst [vmem:[%s370 + $0x3c] sm:$0xf] %v644
        %v677 = vld [vmem:[%s4] sm:$0xff]
        %v678 = vld [vmem:[%s4 + $0x8] sm:$0xff]
        %v679 = vld [vmem:[%s4 + $0x10] sm:$0xff]
        %v680 = vld [vmem:[%s4 + $0x18] sm:$0xff]
        %v681 = vld [vmem:[%s4 + $0x20] sm:$0xff]
        %v682 = vld [vmem:[%s4 + $0x28] sm:$0xff]
        %v683 = vld [vmem:[%s4 + $0x30] sm:$0xff]
        %v684 = vld [vmem:[%s4 + $0x38] sm:$0xff]
        %v685 = vld [vmem:[%s4 + $0x40] sm:$0xff]
        %v686 = vld [vmem:[%s4 + $0x48] sm:$0xff]
        %v687 = vld [vmem:[%s4 + $0x50] sm:$0xff]
        %v688 = vld [vmem:[%s4 + $0x58] sm:$0xff]
        %v689 = vld [vmem:[%s4 + $0x60] sm:$0xff]
        %v690 = vld [vmem:[%s4 + $0x68] sm:$0xff]
        %v691 = vld [vmem:[%s4 + $0x70] sm:$0xff]
        %v692 = vld [vmem:[%s4 + $0x78] sm:$0xff]
        %v693 = vld [vmem:[%s4 + $0x80] sm:$0xff]
        %v694 = vld [vmem:[%s4 + $0x88] sm:$0xff]
        %v695 = vld [vmem:[%s4 + $0x90] sm:$0xff]
        %v696 = vld [vmem:[%s4 + $0x98] sm:$0xff]
        %v697 = vld [vmem:[%s4 + $0xa0] sm:$0xff]
        %v698 = vld [vmem:[%s4 + $0xa8] sm:$0xff]
        %v699 = vld [vmem:[%s4 + $0xb0] sm:$0xff]
        %v700 = vld [vmem:[%s4 + $0xb8] sm:$0xff]
        %v701 = vld [vmem:[%s4 + $0xc0] sm:$0xff]
        %v702 = vld [vmem:[%s4 + $0xc8] sm:$0xff]
        %v703 = vld [vmem:[%s4 + $0xd0] sm:$0xff]
        %v704 = vld [vmem:[%s4 + $0xd8] sm:$0xff]
        %v705 = vld [vmem:[%s4 + $0xe0] sm:$0xff]
        %v706 = vld [vmem:[%s4 + $0xe8] sm:$0xff]
        %v707 = vld [vmem:[%s4 + $0xf0] sm:$0xff]
        %v708 = vld [vmem:[%s4 + $0xf8] sm:$0xff]
        %v709 = vld [vmem:[%s5] sm:$0xf]
        %v711 = vlaneseq
        %v712 = vshrl.u32 %v711, 7
        %v713 = vsub.s32 0, %v712
        %v714 = vrot.slane %v709, %v713
        %v715 = vlaneseq
        %v716 = vshrl.u32 %v715, 7
        %v717 = vsub.s32 1, %v716
        %v718 = vrot.slane %v709, %v717
        %v719 = vlaneseq
        %v720 = vshrl.u32 %v719, 7
        %v721 = vsub.s32 2, %v720
        %v722 = vrot.slane %v709, %v721
        %v723 = vlaneseq
        %v724 = vshrl.u32 %v723, 7
        %v725 = vsub.s32 3, %v724
        %v726 = vrot.slane %v709, %v725
        %v763 = vunpack.c.l.b16 %v677
        %v764 = vunpack.c.h.b16 %v677
        %v765 = vunpack.c.l.b16 %v678
        %v766 = vunpack.c.h.b16 %v678
        %v767 = vunpack.c.l.b16 %v679
        %v768 = vunpack.c.h.b16 %v679
        %v769 = vunpack.c.l.b16 %v680
        %v770 = vunpack.c.h.b16 %v680
        %v771 = vunpack.c.l.b16 %v681
        %v772 = vunpack.c.h.b16 %v681
        %v773 = vunpack.c.l.b16 %v682
        %v774 = vunpack.c.h.b16 %v682
        %v775 = vunpack.c.l.b16 %v683
        %v776 = vunpack.c.h.b16 %v683
        %v777 = vunpack.c.l.b16 %v684
        %v778 = vunpack.c.h.b16 %v684
        %v779 = vunpack.c.l.b16 %v685
        %v780 = vunpack.c.h.b16 %v685
        %v781 = vunpack.c.l.b16 %v686
        %v782 = vunpack.c.h.b16 %v686
        %v783 = vunpack.c.l.b16 %v687
        %v784 = vunpack.c.h.b16 %v687
        %v785 = vunpack.c.l.b16 %v688
        %v786 = vunpack.c.h.b16 %v688
        %v787 = vunpack.c.l.b16 %v689
        %v788 = vunpack.c.h.b16 %v689
        %v789 = vunpack.c.l.b16 %v690
        %v790 = vunpack.c.h.b16 %v690
        %v791 = vunpack.c.l.b16 %v691
        %v792 = vunpack.c.h.b16 %v691
        %v793 = vunpack.c.l.b16 %v692
        %v794 = vunpack.c.h.b16 %v692
        %v795 = vunpack.c.l.b16 %v693
        %v796 = vunpack.c.h.b16 %v693
        %v797 = vunpack.c.l.b16 %v694
        %v798 = vunpack.c.h.b16 %v694
        %v799 = vunpack.c.l.b16 %v695
        %v800 = vunpack.c.h.b16 %v695
        %v801 = vunpack.c.l.b16 %v696
        %v802 = vunpack.c.h.b16 %v696
        %v803 = vunpack.c.l.b16 %v697
        %v804 = vunpack.c.h.b16 %v697
        %v805 = vunpack.c.l.b16 %v698
        %v806 = vunpack.c.h.b16 %v698
        %v807 = vunpack.c.l.b16 %v699
        %v808 = vunpack.c.h.b16 %v699
        %v809 = vunpack.c.l.b16 %v700
        %v810 = vunpack.c.h.b16 %v700
        %v811 = vunpack.c.l.b16 %v701
        %v812 = vunpack.c.h.b16 %v701
        %v813 = vunpack.c.l.b16 %v702
        %v814 = vunpack.c.h.b16 %v702
        %v815 = vunpack.c.l.b16 %v703
        %v816 = vunpack.c.h.b16 %v703
        %v817 = vunpack.c.l.b16 %v704
        %v818 = vunpack.c.h.b16 %v704
        %v819 = vunpack.c.l.b16 %v705
        %v820 = vunpack.c.h.b16 %v705
        %v821 = vunpack.c.l.b16 %v706
        %v822 = vunpack.c.h.b16 %v706
        %v823 = vunpack.c.l.b16 %v707
        %v824 = vunpack.c.h.b16 %v707
        %v825 = vunpack.c.l.b16 %v708
        %v826 = vunpack.c.h.b16 %v708
        %v827 = vpack.c.b16 %v767, %v763
        %v828 = vpack.c.b16 %v768, %v764
        %v829 = vpack.c.b16 %v769, %v765
        %v830 = vpack.c.b16 %v770, %v766
        %v831 = vpack.c.b16 %v775, %v771
        %v832 = vpack.c.b16 %v776, %v772
        %v833 = vpack.c.b16 %v777, %v773
        %v834 = vpack.c.b16 %v778, %v774
        %v835 = vpack.c.b16 %v783, %v779
        %v836 = vpack.c.b16 %v784, %v780
        %v837 = vpack.c.b16 %v785, %v781
        %v838 = vpack.c.b16 %v786, %v782
        %v839 = vpack.c.b16 %v791, %v787
        %v840 = vpack.c.b16 %v792, %v788
        %v841 = vpack.c.b16 %v793, %v789
        %v842 = vpack.c.b16 %v794, %v790
        %v843 = vpack.c.b16 %v799, %v795
        %v844 = vpack.c.b16 %v800, %v796
        %v845 = vpack.c.b16 %v801, %v797
        %v846 = vpack.c.b16 %v802, %v798
        %v847 = vpack.c.b16 %v807, %v803
        %v848 = vpack.c.b16 %v808, %v804
        %v849 = vpack.c.b16 %v809, %v805
        %v850 = vpack.c.b16 %v810, %v806
        %v851 = vpack.c.b16 %v815, %v811
        %v852 = vpack.c.b16 %v816, %v812
        %v853 = vpack.c.b16 %v817, %v813
        %v854 = vpack.c.b16 %v818, %v814
        %v855 = vpack.c.b16 %v823, %v819
        %v856 = vpack.c.b16 %v824, %v820
        %v857 = vpack.c.b16 %v825, %v821
        %v858 = vpack.c.b16 %v826, %v822
        %891 = vmatprep.subr.bf16.mxu0 %v828
        %892 = vmatpush1.bf16.msra.mxu0 %v827
        %893 = vmatprep.subr.bf16.mxu0 %v832
        %894 = vmatpush1.bf16.msra.mxu0 %v831
        %895 = vmatprep.subr.bf16.mxu0 %v836
        %896 = vmatpush1.bf16.msra.mxu0 %v835
        %897 = vmatprep.subr.bf16.mxu0 %v840
        %898 = vmatpush1.bf16.msra.mxu0 %v839
        %899 = vmatprep.subr.bf16.mxu0 %v844
        %900 = vmatpush1.bf16.msra.mxu0 %v843
        %901 = vmatprep.subr.bf16.mxu0 %v848
        %902 = vmatpush1.bf16.msra.mxu0 %v847
        %903 = vmatprep.subr.bf16.mxu0 %v852
        %904 = vmatpush1.bf16.msra.mxu0 %v851
        %905 = vmatprep.subr.bf16.mxu0 %v856
        %906 = vmatpush1.bf16.msra.mxu0 %v855
        %907 = vmatprep.subr.bf16.mxu0 0
        %908 = vmatpush1.bf16.msra.mxu0 0
        %909 = vmatprep.subr.bf16.mxu0 0
        %910 = vmatpush1.bf16.msra.mxu0 0
        %911 = vmatprep.subr.bf16.mxu0 0
        %912 = vmatpush1.bf16.msra.mxu0 0
        %913 = vmatprep.subr.bf16.mxu0 0
        %914 = vmatpush1.bf16.msra.mxu0 0
        %915 = vmatprep.subr.bf16.mxu0 0
        %916 = vmatpush1.bf16.msra.mxu0 0
        %917 = vmatprep.subr.bf16.mxu0 0
        %918 = vmatpush1.bf16.msra.mxu0 0
        %919 = vmatprep.subr.bf16.mxu0 0
        %920 = vmatpush1.bf16.msra.mxu0 0
        %921 = vmatprep.subr.bf16.mxu0 0
        %922 = vmatpush1.bf16.msra.mxu0 0
        %923 = vmatprep.mubr.bf16.mxu0 0
        %924 = vmatmul.mubr.bf16.gmra.mrb[0].mxu0 %v597
        %v925 = vpop.f32.mrb[0].mxu0
        %v926 = vadd.f32 %v714, %v925
        %v927 = vpop.f32.mrb[0].mxu0
        %v928 = vadd.f32 %v718, %v927
        %v929 = vpop.f32.mrb[0].mxu0
        %v930 = vadd.f32 %v714, %v929
        %v931 = vpop.f32.mrb[0].mxu0
        %v932 = vadd.f32 %v718, %v931
        %933 = vmatprep.mubr.bf16.mxu0 0
        %934 = vmatmul.mubr.bf16.gmra.mrb[0].mxu0 %v598
        %v935 = vpop.f32.mrb[0].mxu0
        %v936 = vadd.f32 %v714, %v935
        %v937 = vpop.f32.mrb[0].mxu0
        %v938 = vadd.f32 %v718, %v937
        %v939 = vpop.f32.mrb[0].mxu0
        %v940 = vadd.f32 %v714, %v939
        %v941 = vpop.f32.mrb[0].mxu0
        %v942 = vadd.f32 %v718, %v941
        %943 = vmatprep.mubr.bf16.mxu0 0
        %944 = vmatmul.mubr.bf16.gmra.mrb[0].mxu0 %v599
        %v945 = vpop.f32.mrb[0].mxu0
        %v946 = vadd.f32 %v714, %v945
        %v947 = vpop.f32.mrb[0].mxu0
        %v948 = vadd.f32 %v718, %v947
        %v949 = vpop.f32.mrb[0].mxu0
        %v950 = vadd.f32 %v714, %v949
        %v951 = vpop.f32.mrb[0].mxu0
        %v952 = vadd.f32 %v718, %v951
        %953 = vmatprep.mubr.bf16.mxu0 0
        %954 = vmatmul.mubr.bf16.gmra.mrb[0].mxu0 %v600
        %v955 = vpop.f32.mrb[0].mxu0
        %v956 = vadd.f32 %v714, %v955
        %v957 = vpop.f32.mrb[0].mxu0
        %v958 = vadd.f32 %v718, %v957
        %v959 = vpop.f32.mrb[0].mxu0
        %v960 = vadd.f32 %v714, %v959
        %v961 = vpop.f32.mrb[0].mxu0
        %v962 = vadd.f32 %v718, %v961
        %963 = vmatprep.mubr.bf16.mxu0 0
        %964 = vmatmul.mubr.bf16.gmra.mrb[0].mxu0 %v601
        %v965 = vpop.f32.mrb[0].mxu0
        %v966 = vadd.f32 %v714, %v965
        %v967 = vpop.f32.mrb[0].mxu0
        %v968 = vadd.f32 %v718, %v967
        %v969 = vpop.f32.mrb[0].mxu0
        %v970 = vadd.f32 %v714, %v969
        %v971 = vpop.f32.mrb[0].mxu0
        %v972 = vadd.f32 %v718, %v971
        %973 = vmatprep.mubr.bf16.mxu0 0
        %974 = vmatmul.mubr.bf16.gmra.mrb[0].mxu0 %v602
        %v975 = vpop.f32.mrb[0].mxu0
        %v976 = vadd.f32 %v714, %v975
        %v977 = vpop.f32.mrb[0].mxu0
        %v978 = vadd.f32 %v718, %v977
        %v979 = vpop.f32.mrb[0].mxu0
        %v980 = vadd.f32 %v714, %v979
        %v981 = vpop.f32.mrb[0].mxu0
        %v982 = vadd.f32 %v718, %v981
        %983 = vmatprep.mubr.bf16.mxu0 0
        %984 = vmatmul.mubr.bf16.gmra.mrb[0].mxu0 %v603
        %v985 = vpop.f32.mrb[0].mxu0
        %v986 = vadd.f32 %v714, %v985
        %v987 = vpop.f32.mrb[0].mxu0
        %v988 = vadd.f32 %v718, %v987
        %v989 = vpop.f32.mrb[0].mxu0
        %v990 = vadd.f32 %v714, %v989
        %v991 = vpop.f32.mrb[0].mxu0
        %v992 = vadd.f32 %v718, %v991
        %993 = vmatprep.mubr.bf16.mxu0 0
        %994 = vmatmul.mubr.bf16.gmra.mrb[0].mxu0 %v604
        %v995 = vpop.f32.mrb[0].mxu0
        %v996 = vadd.f32 %v714, %v995
        %v997 = vpop.f32.mrb[0].mxu0
        %v998 = vadd.f32 %v718, %v997
        %v999 = vpop.f32.mrb[0].mxu0
        %v1000 = vadd.f32 %v714, %v999
        %v1001 = vpop.f32.mrb[0].mxu0
        %v1002 = vadd.f32 %v718, %v1001
        %1003 = vdwg.mxu0
        %1004 = vmatprep.subr.bf16.mxu0 %v830
        %1005 = vmatpush1.bf16.msra.mxu0 %v829
        %1006 = vmatprep.subr.bf16.mxu0 %v834
        %1007 = vmatpush1.bf16.msra.mxu0 %v833
        %1008 = vmatprep.subr.bf16.mxu0 %v838
        %1009 = vmatpush1.bf16.msra.mxu0 %v837
        %1010 = vmatprep.subr.bf16.mxu0 %v842
        %1011 = vmatpush1.bf16.msra.mxu0 %v841
        %1012 = vmatprep.subr.bf16.mxu0 %v846
        %1013 = vmatpush1.bf16.msra.mxu0 %v845
        %1014 = vmatprep.subr.bf16.mxu0 %v850
        %1015 = vmatpush1.bf16.msra.mxu0 %v849
        %1016 = vmatprep.subr.bf16.mxu0 %v854
        %1017 = vmatpush1.bf16.msra.mxu0 %v853
        %1018 = vmatprep.subr.bf16.mxu0 %v858
        %1019 = vmatpush1.bf16.msra.mxu0 %v857
        %1020 = vmatprep.subr.bf16.mxu0 0
        %1021 = vmatpush1.bf16.msra.mxu0 0
        %1022 = vmatprep.subr.bf16.mxu0 0
        %1023 = vmatpush1.bf16.msra.mxu0 0
        %1024 = vmatprep.subr.bf16.mxu0 0
        %1025 = vmatpush1.bf16.msra.mxu0 0
        %1026 = vmatprep.subr.bf16.mxu0 0
        %1027 = vmatpush1.bf16.msra.mxu0 0
        %1028 = vmatprep.subr.bf16.mxu0 0
        %1029 = vmatpush1.bf16.msra.mxu0 0
        %1030 = vmatprep.subr.bf16.mxu0 0
        %1031 = vmatpush1.bf16.msra.mxu0 0
        %1032 = vmatprep.subr.bf16.mxu0 0
        %1033 = vmatpush1.bf16.msra.mxu0 0
        %1034 = vmatprep.subr.bf16.mxu0 0
        %1035 = vmatpush1.bf16.msra.mxu0 0
        %1036 = vmatprep.mubr.bf16.mxu0 0
        %1037 = vmatmul.mubr.bf16.gmra.mrb[0].mxu0 %v597
        %v1038 = vpop.f32.mrb[0].mxu0
        %v1039 = vadd.f32 %v722, %v1038
        %v1040 = vpop.f32.mrb[0].mxu0
        %v1041 = vadd.f32 %v726, %v1040
        %v1042 = vpop.f32.mrb[0].mxu0
        %v1043 = vadd.f32 %v722, %v1042
        %v1044 = vpop.f32.mrb[0].mxu0
        %v1045 = vadd.f32 %v726, %v1044
        %1046 = vmatprep.mubr.bf16.mxu0 0
        %1047 = vmatmul.mubr.bf16.gmra.mrb[0].mxu0 %v598
        %v1048 = vpop.f32.mrb[0].mxu0
        %v1049 = vadd.f32 %v722, %v1048
        %v1050 = vpop.f32.mrb[0].mxu0
        %v1051 = vadd.f32 %v726, %v1050
        %v1052 = vpop.f32.mrb[0].mxu0
        %v1053 = vadd.f32 %v722, %v1052
        %v1054 = vpop.f32.mrb[0].mxu0
        %v1055 = vadd.f32 %v726, %v1054
        %1056 = vmatprep.mubr.bf16.mxu0 0
        %1057 = vmatmul.mubr.bf16.gmra.mrb[0].mxu0 %v599
        %v1058 = vpop.f32.mrb[0].mxu0
        %v1059 = vadd.f32 %v722, %v1058
        %v1060 = vpop.f32.mrb[0].mxu0
        %v1061 = vadd.f32 %v726, %v1060
        %v1062 = vpop.f32.mrb[0].mxu0
        %v1063 = vadd.f32 %v722, %v1062
        %v1064 = vpop.f32.mrb[0].mxu0
        %v1065 = vadd.f32 %v726, %v1064
        %1066 = vmatprep.mubr.bf16.mxu0 0
        %1067 = vmatmul.mubr.bf16.gmra.mrb[0].mxu0 %v600
        %v1068 = vpop.f32.mrb[0].mxu0
        %v1069 = vadd.f32 %v722, %v1068
        %v1070 = vpop.f32.mrb[0].mxu0
        %v1071 = vadd.f32 %v726, %v1070
        %v1072 = vpop.f32.mrb[0].mxu0
        %v1073 = vadd.f32 %v722, %v1072
        %v1074 = vpop.f32.mrb[0].mxu0
        %v1075 = vadd.f32 %v726, %v1074
        %1076 = vmatprep.mubr.bf16.mxu0 0
        %1077 = vmatmul.mubr.bf16.gmra.mrb[0].mxu0 %v601
        %v1078 = vpop.f32.mrb[0].mxu0
        %v1079 = vadd.f32 %v722, %v1078
        %v1080 = vpop.f32.mrb[0].mxu0
        %v1081 = vadd.f32 %v726, %v1080
        %v1082 = vpop.f32.mrb[0].mxu0
        %v1083 = vadd.f32 %v722, %v1082
        %v1084 = vpop.f32.mrb[0].mxu0
        %v1085 = vadd.f32 %v726, %v1084
        %1086 = vmatprep.mubr.bf16.mxu0 0
        %1087 = vmatmul.mubr.bf16.gmra.mrb[0].mxu0 %v602
        %v1088 = vpop.f32.mrb[0].mxu0
        %v1089 = vadd.f32 %v722, %v1088
        %v1090 = vpop.f32.mrb[0].mxu0
        %v1091 = vadd.f32 %v726, %v1090
        %v1092 = vpop.f32.mrb[0].mxu0
        %v1093 = vadd.f32 %v722, %v1092
        %v1094 = vpop.f32.mrb[0].mxu0
        %v1095 = vadd.f32 %v726, %v1094
        %1096 = vmatprep.mubr.bf16.mxu0 0
        %1097 = vmatmul.mubr.bf16.gmra.mrb[0].mxu0 %v603
        %v1098 = vpop.f32.mrb[0].mxu0
        %v1099 = vadd.f32 %v722, %v1098
        %v1100 = vpop.f32.mrb[0].mxu0
        %v1101 = vadd.f32 %v726, %v1100
        %v1102 = vpop.f32.mrb[0].mxu0
        %v1103 = vadd.f32 %v722, %v1102
        %v1104 = vpop.f32.mrb[0].mxu0
        %v1105 = vadd.f32 %v726, %v1104
        %1106 = vmatprep.mubr.bf16.mxu0 0
        %1107 = vmatmul.mubr.bf16.gmra.mrb[0].mxu0 %v604
        %v1108 = vpop.f32.mrb[0].mxu0
        %v1109 = vadd.f32 %v722, %v1108
        %v1110 = vpop.f32.mrb[0].mxu0
        %v1111 = vadd.f32 %v726, %v1110
        %v1112 = vpop.f32.mrb[0].mxu0
        %v1113 = vadd.f32 %v722, %v1112
        %v1114 = vpop.f32.mrb[0].mxu0
        %v1115 = vadd.f32 %v726, %v1114
        %1116 = vdwg.mxu0
        %v1117 = vpack.c.bf16 %v1043, %v1039
        %v1118 = vpack.c.bf16 %v1045, %v1041
        %v1119 = vpack.c.bf16 %v1053, %v1049
        %v1120 = vpack.c.bf16 %v1055, %v1051
        %v1121 = vpack.c.bf16 %v1063, %v1059
        %v1122 = vpack.c.bf16 %v1065, %v1061
        %v1123 = vpack.c.bf16 %v1073, %v1069
        %v1124 = vpack.c.bf16 %v1075, %v1071
        %v1125 = vpack.c.bf16 %v1083, %v1079
        %v1126 = vpack.c.bf16 %v1085, %v1081
        %v1127 = vpack.c.bf16 %v1093, %v1089
        %v1128 = vpack.c.bf16 %v1095, %v1091
        %v1129 = vpack.c.bf16 %v1103, %v1099
        %v1130 = vpack.c.bf16 %v1105, %v1101
        %v1131 = vpack.c.bf16 %v1113, %v1109
        %v1132 = vpack.c.bf16 %v1115, %v1111
        %v1149 = vunpack.c.l.b16 %v1117
        %v1150 = vunpack.c.l.b16 %v1118
        %v1151 = vunpack.c.h.b16 %v1117
        %v1152 = vunpack.c.h.b16 %v1118
        %v1153 = vunpack.c.l.b16 %v1119
        %v1154 = vunpack.c.l.b16 %v1120
        %v1155 = vunpack.c.h.b16 %v1119
        %v1156 = vunpack.c.h.b16 %v1120
        %v1157 = vunpack.c.l.b16 %v1121
        %v1158 = vunpack.c.l.b16 %v1122
        %v1159 = vunpack.c.h.b16 %v1121
        %v1160 = vunpack.c.h.b16 %v1122
        %v1161 = vunpack.c.l.b16 %v1123
        %v1162 = vunpack.c.l.b16 %v1124
        %v1163 = vunpack.c.h.b16 %v1123
        %v1164 = vunpack.c.h.b16 %v1124
        %v1165 = vunpack.c.l.b16 %v1125
        %v1166 = vunpack.c.l.b16 %v1126
        %v1167 = vunpack.c.h.b16 %v1125
        %v1168 = vunpack.c.h.b16 %v1126
        %v1169 = vunpack.c.l.b16 %v1127
        %v1170 = vunpack.c.l.b16 %v1128
        %v1171 = vunpack.c.h.b16 %v1127
        %v1172 = vunpack.c.h.b16 %v1128
        %v1173 = vunpack.c.l.b16 %v1129
        %v1174 = vunpack.c.l.b16 %v1130
        %v1175 = vunpack.c.h.b16 %v1129
        %v1176 = vunpack.c.h.b16 %v1130
        %v1177 = vunpack.c.l.b16 %v1131
        %v1178 = vunpack.c.l.b16 %v1132
        %v1179 = vunpack.c.h.b16 %v1131
        %v1180 = vunpack.c.h.b16 %v1132
        %v1181 = vpack.c.b16 %v1150, %v1149
        %v1182 = vpack.c.b16 %v1152, %v1151
        %v1183 = vpack.c.b16 %v1154, %v1153
        %v1184 = vpack.c.b16 %v1156, %v1155
        %v1185 = vpack.c.b16 %v1158, %v1157
        %v1186 = vpack.c.b16 %v1160, %v1159
        %v1187 = vpack.c.b16 %v1162, %v1161
        %v1188 = vpack.c.b16 %v1164, %v1163
        %v1189 = vpack.c.b16 %v1166, %v1165
        %v1190 = vpack.c.b16 %v1168, %v1167
        %v1191 = vpack.c.b16 %v1170, %v1169
        %v1192 = vpack.c.b16 %v1172, %v1171
        %v1193 = vpack.c.b16 %v1174, %v1173
        %v1194 = vpack.c.b16 %v1176, %v1175
        %v1195 = vpack.c.b16 %v1178, %v1177
        %v1196 = vpack.c.b16 %v1180, %v1179
        %1213 = vst [vmem:[%s363] sm:$0xff] %v1181
        %1214 = vst [vmem:[%s363 + $0x8] sm:$0xff] %v1182
        %1215 = vst [vmem:[%s363 + $0x10] sm:$0xff] %v1183
        %1216 = vst [vmem:[%s363 + $0x18] sm:$0xff] %v1184
        %1217 = vst [vmem:[%s363 + $0x20] sm:$0xff] %v1185
        %1218 = vst [vmem:[%s363 + $0x28] sm:$0xff] %v1186
        %1219 = vst [vmem:[%s363 + $0x30] sm:$0xff] %v1187
        %1220 = vst [vmem:[%s363 + $0x38] sm:$0xff] %v1188
        %1221 = vst [vmem:[%s363 + $0x40] sm:$0xff] %v1189
        %1222 = vst [vmem:[%s363 + $0x48] sm:$0xff] %v1190
        %1223 = vst [vmem:[%s363 + $0x50] sm:$0xff] %v1191
        %1224 = vst [vmem:[%s363 + $0x58] sm:$0xff] %v1192
        %1225 = vst [vmem:[%s363 + $0x60] sm:$0xff] %v1193
        %1226 = vst [vmem:[%s363 + $0x68] sm:$0xff] %v1194
        %1227 = vst [vmem:[%s363 + $0x70] sm:$0xff] %v1195
        %1228 = vst [vmem:[%s363 + $0x78] sm:$0xff] %v1196
        %v1229 = vmax.f32 %v926, %v928
        %1230 = vmax.xlane.f32.xlu0 %v1229
        %v1231 = vpop.xlane.xlu0 %1230
        %v1232 = vmax.f32 %v930, %v932
        %1233 = vmax.xlane.f32.xlu0 %v1232
        %v1234 = vpop.xlane.xlu0 %1233
        %v1235 = vmax.f32 %v936, %v938
        %1236 = vmax.xlane.f32.xlu0 %v1235
        %v1237 = vpop.xlane.xlu0 %1236
        %v1238 = vmax.f32 %v940, %v942
        %1239 = vmax.xlane.f32.xlu0 %v1238
        %v1240 = vpop.xlane.xlu0 %1239
        %v1241 = vmax.f32 %v946, %v948
        %1242 = vmax.xlane.f32.xlu0 %v1241
        %v1243 = vpop.xlane.xlu0 %1242
        %v1244 = vmax.f32 %v950, %v952
        %1245 = vmax.xlane.f32.xlu0 %v1244
        %v1246 = vpop.xlane.xlu0 %1245
        %v1247 = vmax.f32 %v956, %v958
        %1248 = vmax.xlane.f32.xlu0 %v1247
        %v1249 = vpop.xlane.xlu0 %1248
        %v1250 = vmax.f32 %v960, %v962
        %1251 = vmax.xlane.f32.xlu0 %v1250
        %v1252 = vpop.xlane.xlu0 %1251
        %v1253 = vmax.f32 %v966, %v968
        %1254 = vmax.xlane.f32.xlu0 %v1253
        %v1255 = vpop.xlane.xlu0 %1254
        %v1256 = vmax.f32 %v970, %v972
        %1257 = vmax.xlane.f32.xlu0 %v1256
        %v1258 = vpop.xlane.xlu0 %1257
        %v1259 = vmax.f32 %v976, %v978
        %1260 = vmax.xlane.f32.xlu0 %v1259
        %v1261 = vpop.xlane.xlu0 %1260
        %v1262 = vmax.f32 %v980, %v982
        %1263 = vmax.xlane.f32.xlu0 %v1262
        %v1264 = vpop.xlane.xlu0 %1263
        %v1265 = vmax.f32 %v986, %v988
        %1266 = vmax.xlane.f32.xlu0 %v1265
        %v1267 = vpop.xlane.xlu0 %1266
        %v1268 = vmax.f32 %v990, %v992
        %1269 = vmax.xlane.f32.xlu0 %v1268
        %v1270 = vpop.xlane.xlu0 %1269
        %v1271 = vmax.f32 %v996, %v998
        %1272 = vmax.xlane.f32.xlu0 %v1271
        %v1273 = vpop.xlane.xlu0 %1272
        %v1274 = vmax.f32 %v1000, %v1002
        %1275 = vmax.xlane.f32.xlu0 %v1274
        %v1276 = vpop.xlane.xlu0 %1275
        %v1277 = vsub.f32 %v926, %v1231
        %v1278 = vsub.f32 %v928, %v1231
        %v1279 = vsub.f32 %v930, %v1234
        %v1280 = vsub.f32 %v932, %v1234
        %v1281 = vsub.f32 %v936, %v1237
        %v1282 = vsub.f32 %v938, %v1237
        %v1283 = vsub.f32 %v940, %v1240
        %v1284 = vsub.f32 %v942, %v1240
        %v1285 = vsub.f32 %v946, %v1243
        %v1286 = vsub.f32 %v948, %v1243
        %v1287 = vsub.f32 %v950, %v1246
        %v1288 = vsub.f32 %v952, %v1246
        %v1289 = vsub.f32 %v956, %v1249
        %v1290 = vsub.f32 %v958, %v1249
        %v1291 = vsub.f32 %v960, %v1252
        %v1292 = vsub.f32 %v962, %v1252
        %v1293 = vsub.f32 %v966, %v1255
        %v1294 = vsub.f32 %v968, %v1255
        %v1295 = vsub.f32 %v970, %v1258
        %v1296 = vsub.f32 %v972, %v1258
        %v1297 = vsub.f32 %v976, %v1261
        %v1298 = vsub.f32 %v978, %v1261
        %v1299 = vsub.f32 %v980, %v1264
        %v1300 = vsub.f32 %v982, %v1264
        %v1301 = vsub.f32 %v986, %v1267
        %v1302 = vsub.f32 %v988, %v1267
        %v1303 = vsub.f32 %v990, %v1270
        %v1304 = vsub.f32 %v992, %v1270
        %v1305 = vsub.f32 %v996, %v1273
        %v1306 = vsub.f32 %v998, %v1273
        %v1307 = vsub.f32 %v1000, %v1276
        %v1308 = vsub.f32 %v1002, %v1276
        %v1309 = vmul.f32 %v1277, 1.442695
        %v1310 = vpow.pop %v1309
        %v1311 = vmul.f32 %v1278, 1.442695
        %v1312 = vpow.pop %v1311
        %v1313 = vmul.f32 %v1279, 1.442695
        %v1314 = vpow.pop %v1313
        %v1315 = vmul.f32 %v1280, 1.442695
        %v1316 = vpow.pop %v1315
        %v1317 = vmul.f32 %v1281, 1.442695
        %v1318 = vpow.pop %v1317
        %v1319 = vmul.f32 %v1282, 1.442695
        %v1320 = vpow.pop %v1319
        %v1321 = vmul.f32 %v1283, 1.442695
        %v1322 = vpow.pop %v1321
        %v1323 = vmul.f32 %v1284, 1.442695
        %v1324 = vpow.pop %v1323
        %v1325 = vmul.f32 %v1285, 1.442695
        %v1326 = vpow.pop %v1325
        %v1327 = vmul.f32 %v1286, 1.442695
        %v1328 = vpow.pop %v1327
        %v1329 = vmul.f32 %v1287, 1.442695
        %v1330 = vpow.pop %v1329
        %v1331 = vmul.f32 %v1288, 1.442695
        %v1332 = vpow.pop %v1331
        %v1333 = vmul.f32 %v1289, 1.442695
        %v1334 = vpow.pop %v1333
        %v1335 = vmul.f32 %v1290, 1.442695
        %v1336 = vpow.pop %v1335
        %v1337 = vmul.f32 %v1291, 1.442695
        %v1338 = vpow.pop %v1337
        %v1339 = vmul.f32 %v1292, 1.442695
        %v1340 = vpow.pop %v1339
        %v1341 = vmul.f32 %v1293, 1.442695
        %v1342 = vpow.pop %v1341
        %v1343 = vmul.f32 %v1294, 1.442695
        %v1344 = vpow.pop %v1343
        %v1345 = vmul.f32 %v1295, 1.442695
        %v1346 = vpow.pop %v1345
        %v1347 = vmul.f32 %v1296, 1.442695
        %v1348 = vpow.pop %v1347
        %v1349 = vmul.f32 %v1297, 1.442695
        %v1350 = vpow.pop %v1349
        %v1351 = vmul.f32 %v1298, 1.442695
        %v1352 = vpow.pop %v1351
        %v1353 = vmul.f32 %v1299, 1.442695
        %v1354 = vpow.pop %v1353
        %v1355 = vmul.f32 %v1300, 1.442695
        %v1356 = vpow.pop %v1355
        %v1357 = vmul.f32 %v1301, 1.442695
        %v1358 = vpow.pop %v1357
        %v1359 = vmul.f32 %v1302, 1.442695
        %v1360 = vpow.pop %v1359
        %v1361 = vmul.f32 %v1303, 1.442695
        %v1362 = vpow.pop %v1361
        %v1363 = vmul.f32 %v1304, 1.442695
        %v1364 = vpow.pop %v1363
        %v1365 = vmul.f32 %v1305, 1.442695
        %v1366 = vpow.pop %v1365
        %v1367 = vmul.f32 %v1306, 1.442695
        %v1368 = vpow.pop %v1367
        %v1369 = vmul.f32 %v1307, 1.442695
        %v1370 = vpow.pop %v1369
        %v1371 = vmul.f32 %v1308, 1.442695
        %v1372 = vpow.pop %v1371
        %v1373 = vadd.f32 %v1310, %v1312
        %1374 = vadd.xlane.f32.xlu0 %v1373
        %v1375 = vpop.xlane.xlu0 %1374
        %v1376 = vadd.f32 %v1314, %v1316
        %1377 = vadd.xlane.f32.xlu0 %v1376
        %v1378 = vpop.xlane.xlu0 %1377
        %v1379 = vadd.f32 %v1318, %v1320
        %1380 = vadd.xlane.f32.xlu0 %v1379
        %v1381 = vpop.xlane.xlu0 %1380
        %v1382 = vadd.f32 %v1322, %v1324
        %1383 = vadd.xlane.f32.xlu0 %v1382
        %v1384 = vpop.xlane.xlu0 %1383
        %v1385 = vadd.f32 %v1326, %v1328
        %1386 = vadd.xlane.f32.xlu0 %v1385
        %v1387 = vpop.xlane.xlu0 %1386
        %v1388 = vadd.f32 %v1330, %v1332
        %1389 = vadd.xlane.f32.xlu0 %v1388
        %v1390 = vpop.xlane.xlu0 %1389
        %v1391 = vadd.f32 %v1334, %v1336
        %1392 = vadd.xlane.f32.xlu0 %v1391
        %v1393 = vpop.xlane.xlu0 %1392
        %v1394 = vadd.f32 %v1338, %v1340
        %1395 = vadd.xlane.f32.xlu0 %v1394
        %v1396 = vpop.xlane.xlu0 %1395
        %v1397 = vadd.f32 %v1342, %v1344
        %1398 = vadd.xlane.f32.xlu0 %v1397
        %v1399 = vpop.xlane.xlu0 %1398
        %v1400 = vadd.f32 %v1346, %v1348
        %1401 = vadd.xlane.f32.xlu0 %v1400
        %v1402 = vpop.xlane.xlu0 %1401
        %v1403 = vadd.f32 %v1350, %v1352
        %1404 = vadd.xlane.f32.xlu0 %v1403
        %v1405 = vpop.xlane.xlu0 %1404
        %v1406 = vadd.f32 %v1354, %v1356
        %1407 = vadd.xlane.f32.xlu0 %v1406
        %v1408 = vpop.xlane.xlu0 %1407
        %v1409 = vadd.f32 %v1358, %v1360
        %1410 = vadd.xlane.f32.xlu0 %v1409
        %v1411 = vpop.xlane.xlu0 %1410
        %v1412 = vadd.f32 %v1362, %v1364
        %1413 = vadd.xlane.f32.xlu0 %v1412
        %v1414 = vpop.xlane.xlu0 %1413
        %v1415 = vadd.f32 %v1366, %v1368
        %1416 = vadd.xlane.f32.xlu0 %v1415
        %v1417 = vpop.xlane.xlu0 %1416
        %v1418 = vadd.f32 %v1370, %v1372
        %1419 = vadd.xlane.f32.xlu0 %v1418
        %v1420 = vpop.xlane.xlu0 %1419
        %v1421 = vrcp.pop %v1375
        %v1422 = vmul.f32 %v1310, %v1421
        %v1423 = vmul.f32 %v1312, %v1421
        %v1424 = vrcp.pop %v1378
        %v1425 = vmul.f32 %v1314, %v1424
        %v1426 = vmul.f32 %v1316, %v1424
        %v1427 = vrcp.pop %v1381
        %v1428 = vmul.f32 %v1318, %v1427
        %v1429 = vmul.f32 %v1320, %v1427
        %v1430 = vrcp.pop %v1384
        %v1431 = vmul.f32 %v1322, %v1430
        %v1432 = vmul.f32 %v1324, %v1430
        %v1433 = vrcp.pop %v1387
        %v1434 = vmul.f32 %v1326, %v1433
        %v1435 = vmul.f32 %v1328, %v1433
        %v1436 = vrcp.pop %v1390
        %v1437 = vmul.f32 %v1330, %v1436
        %v1438 = vmul.f32 %v1332, %v1436
        %v1439 = vrcp.pop %v1393
        %v1440 = vmul.f32 %v1334, %v1439
        %v1441 = vmul.f32 %v1336, %v1439
        %v1442 = vrcp.pop %v1396
        %v1443 = vmul.f32 %v1338, %v1442
        %v1444 = vmul.f32 %v1340, %v1442
        %v1445 = vrcp.pop %v1399
        %v1446 = vmul.f32 %v1342, %v1445
        %v1447 = vmul.f32 %v1344, %v1445
        %v1448 = vrcp.pop %v1402
        %v1449 = vmul.f32 %v1346, %v1448
        %v1450 = vmul.f32 %v1348, %v1448
        %v1451 = vrcp.pop %v1405
        %v1452 = vmul.f32 %v1350, %v1451
        %v1453 = vmul.f32 %v1352, %v1451
        %v1454 = vrcp.pop %v1408
        %v1455 = vmul.f32 %v1354, %v1454
        %v1456 = vmul.f32 %v1356, %v1454
        %v1457 = vrcp.pop %v1411
        %v1458 = vmul.f32 %v1358, %v1457
        %v1459 = vmul.f32 %v1360, %v1457
        %v1460 = vrcp.pop %v1414
        %v1461 = vmul.f32 %v1362, %v1460
        %v1462 = vmul.f32 %v1364, %v1460
        %v1463 = vrcp.pop %v1417
        %v1464 = vmul.f32 %v1366, %v1463
        %v1465 = vmul.f32 %v1368, %v1463
        %v1466 = vrcp.pop %v1420
        %v1467 = vmul.f32 %v1370, %v1466
        %v1468 = vmul.f32 %v1372, %v1466
        %v1469 = vpack.c.bf16 %v1425, %v1422
        %v1470 = vpack.c.bf16 %v1426, %v1423
        %v1471 = vpack.c.bf16 %v1431, %v1428
        %v1472 = vpack.c.bf16 %v1432, %v1429
        %v1473 = vpack.c.bf16 %v1437, %v1434
        %v1474 = vpack.c.bf16 %v1438, %v1435
        %v1475 = vpack.c.bf16 %v1443, %v1440
        %v1476 = vpack.c.bf16 %v1444, %v1441
        %v1477 = vpack.c.bf16 %v1449, %v1446
        %v1478 = vpack.c.bf16 %v1450, %v1447
        %v1479 = vpack.c.bf16 %v1455, %v1452
        %v1480 = vpack.c.bf16 %v1456, %v1453
        %v1481 = vpack.c.bf16 %v1461, %v1458
        %v1482 = vpack.c.bf16 %v1462, %v1459
        %v1483 = vpack.c.bf16 %v1467, %v1464
        %v1484 = vpack.c.bf16 %v1468, %v1465
        %v1501 = vunpack.c.l.b16 %v1469
        %v1502 = vunpack.c.l.b16 %v1470
        %v1503 = vunpack.c.h.b16 %v1469
        %v1504 = vunpack.c.h.b16 %v1470
        %v1505 = vunpack.c.l.b16 %v1471
        %v1506 = vunpack.c.l.b16 %v1472
        %v1507 = vunpack.c.h.b16 %v1471
        %v1508 = vunpack.c.h.b16 %v1472
        %v1509 = vunpack.c.l.b16 %v1473
        %v1510 = vunpack.c.l.b16 %v1474
        %v1511 = vunpack.c.h.b16 %v1473
        %v1512 = vunpack.c.h.b16 %v1474
        %v1513 = vunpack.c.l.b16 %v1475
        %v1514 = vunpack.c.l.b16 %v1476
        %v1515 = vunpack.c.h.b16 %v1475
        %v1516 = vunpack.c.h.b16 %v1476
        %v1517 = vunpack.c.l.b16 %v1477
        %v1518 = vunpack.c.l.b16 %v1478
        %v1519 = vunpack.c.h.b16 %v1477
        %v1520 = vunpack.c.h.b16 %v1478
        %v1521 = vunpack.c.l.b16 %v1479
        %v1522 = vunpack.c.l.b16 %v1480
        %v1523 = vunpack.c.h.b16 %v1479
        %v1524 = vunpack.c.h.b16 %v1480
        %v1525 = vunpack.c.l.b16 %v1481
        %v1526 = vunpack.c.l.b16 %v1482
        %v1527 = vunpack.c.h.b16 %v1481
        %v1528 = vunpack.c.h.b16 %v1482
        %v1529 = vunpack.c.l.b16 %v1483
        %v1530 = vunpack.c.l.b16 %v1484
        %v1531 = vunpack.c.h.b16 %v1483
        %v1532 = vunpack.c.h.b16 %v1484
        %v1533 = vpack.c.b16 %v1502, %v1501
        %v1534 = vpack.c.b16 %v1504, %v1503
        %v1535 = vpack.c.b16 %v1506, %v1505
        %v1536 = vpack.c.b16 %v1508, %v1507
        %v1537 = vpack.c.b16 %v1510, %v1509
        %v1538 = vpack.c.b16 %v1512, %v1511
        %v1539 = vpack.c.b16 %v1514, %v1513
        %v1540 = vpack.c.b16 %v1516, %v1515
        %v1541 = vpack.c.b16 %v1518, %v1517
        %v1542 = vpack.c.b16 %v1520, %v1519
        %v1543 = vpack.c.b16 %v1522, %v1521
        %v1544 = vpack.c.b16 %v1524, %v1523
        %v1545 = vpack.c.b16 %v1526, %v1525
        %v1546 = vpack.c.b16 %v1528, %v1527
        %v1547 = vpack.c.b16 %v1530, %v1529
        %v1548 = vpack.c.b16 %v1532, %v1531
        %1565 = vst [vmem:[%s349] sm:$0xff] %v1533
        %1566 = vst [vmem:[%s349 + $0x8] sm:$0xff] %v1534
        %1567 = vst [vmem:[%s349 + $0x10] sm:$0xff] %v1535
        %1568 = vst [vmem:[%s349 + $0x18] sm:$0xff] %v1536
        %1569 = vst [vmem:[%s349 + $0x20] sm:$0xff] %v1537
        %1570 = vst [vmem:[%s349 + $0x28] sm:$0xff] %v1538
        %1571 = vst [vmem:[%s349 + $0x30] sm:$0xff] %v1539
        %1572 = vst [vmem:[%s349 + $0x38] sm:$0xff] %v1540
        %1573 = vst [vmem:[%s349 + $0x40] sm:$0xff] %v1541
        %1574 = vst [vmem:[%s349 + $0x48] sm:$0xff] %v1542
        %1575 = vst [vmem:[%s349 + $0x50] sm:$0xff] %v1543
        %1576 = vst [vmem:[%s349 + $0x58] sm:$0xff] %v1544
        %1577 = vst [vmem:[%s349 + $0x60] sm:$0xff] %v1545
        %1578 = vst [vmem:[%s349 + $0x68] sm:$0xff] %v1546
        %1579 = vst [vmem:[%s349 + $0x70] sm:$0xff] %v1547
        %1580 = vst [vmem:[%s349 + $0x78] sm:$0xff] %v1548
        %v1581 = vld [vmem:[%s381] sm:$0xff]
        %v1582 = vld [vmem:[%s381 + $0x8] sm:$0xff]
        %v1583 = vld [vmem:[%s381 + $0x10] sm:$0xff]
        %v1584 = vld [vmem:[%s381 + $0x18] sm:$0xff]
        %v1585 = vld [vmem:[%s381 + $0x20] sm:$0xff]
        %v1586 = vld [vmem:[%s381 + $0x28] sm:$0xff]
        %v1587 = vld [vmem:[%s381 + $0x30] sm:$0xff]
        %v1588 = vld [vmem:[%s381 + $0x38] sm:$0xff]
        %v1589 = vld [vmem:[%s381 + $0x40] sm:$0xff]
        %v1590 = vld [vmem:[%s381 + $0x48] sm:$0xff]
        %v1591 = vld [vmem:[%s381 + $0x50] sm:$0xff]
        %v1592 = vld [vmem:[%s381 + $0x58] sm:$0xff]
        %v1593 = vld [vmem:[%s381 + $0x60] sm:$0xff]
        %v1594 = vld [vmem:[%s381 + $0x68] sm:$0xff]
        %v1595 = vld [vmem:[%s381 + $0x70] sm:$0xff]
        %v1596 = vld [vmem:[%s381 + $0x78] sm:$0xff]
        %v1597 = vmul.f32 %v1581, 1.442695
        %v1598 = vpow.pop %v1597
        %v1599 = vmul.f32 %v1582, 1.442695
        %v1600 = vpow.pop %v1599
        %v1601 = vmul.f32 %v1583, 1.442695
        %v1602 = vpow.pop %v1601
        %v1603 = vmul.f32 %v1584, 1.442695
        %v1604 = vpow.pop %v1603
        %v1605 = vmul.f32 %v1585, 1.442695
        %v1606 = vpow.pop %v1605
        %v1607 = vmul.f32 %v1586, 1.442695
        %v1608 = vpow.pop %v1607
        %v1609 = vmul.f32 %v1587, 1.442695
        %v1610 = vpow.pop %v1609
        %v1611 = vmul.f32 %v1588, 1.442695
        %v1612 = vpow.pop %v1611
        %v1613 = vmul.f32 %v1589, 1.442695
        %v1614 = vpow.pop %v1613
        %v1615 = vmul.f32 %v1590, 1.442695
        %v1616 = vpow.pop %v1615
        %v1617 = vmul.f32 %v1591, 1.442695
        %v1618 = vpow.pop %v1617
        %v1619 = vmul.f32 %v1592, 1.442695
        %v1620 = vpow.pop %v1619
        %v1621 = vmul.f32 %v1593, 1.442695
        %v1622 = vpow.pop %v1621
        %v1623 = vmul.f32 %v1594, 1.442695
        %v1624 = vpow.pop %v1623
        %v1625 = vmul.f32 %v1595, 1.442695
        %v1626 = vpow.pop %v1625
        %v1627 = vmul.f32 %v1596, 1.442695
        %v1628 = vpow.pop %v1627
        %1630 = vset.pattern.permute.xlu0 0
        %1631 = vperm.xlu0 %1630, %v1598
        %v1632 = vpop.permute.xlu0 %1631
        %1635 = vset.pattern.permute.xlu0 0
        %1636 = vperm.xlu0 %1635, %v1600
        %v1637 = vpop.permute.xlu0 %1636
        %1640 = vset.pattern.permute.xlu0 0
        %1641 = vperm.xlu0 %1640, %v1602
        %v1642 = vpop.permute.xlu0 %1641
        %1645 = vset.pattern.permute.xlu0 0
        %1646 = vperm.xlu0 %1645, %v1604
        %v1647 = vpop.permute.xlu0 %1646
        %1650 = vset.pattern.permute.xlu0 0
        %1651 = vperm.xlu0 %1650, %v1606
        %v1652 = vpop.permute.xlu0 %1651
        %1655 = vset.pattern.permute.xlu0 0
        %1656 = vperm.xlu0 %1655, %v1608
        %v1657 = vpop.permute.xlu0 %1656
        %1660 = vset.pattern.permute.xlu0 0
        %1661 = vperm.xlu0 %1660, %v1610
        %v1662 = vpop.permute.xlu0 %1661
        %1665 = vset.pattern.permute.xlu0 0
        %1666 = vperm.xlu0 %1665, %v1612
        %v1667 = vpop.permute.xlu0 %1666
        %1670 = vset.pattern.permute.xlu0 0
        %1671 = vperm.xlu0 %1670, %v1614
        %v1672 = vpop.permute.xlu0 %1671
        %1675 = vset.pattern.permute.xlu0 0
        %1676 = vperm.xlu0 %1675, %v1616
        %v1677 = vpop.permute.xlu0 %1676
        %1680 = vset.pattern.permute.xlu0 0
        %1681 = vperm.xlu0 %1680, %v1618
        %v1682 = vpop.permute.xlu0 %1681
        %1685 = vset.pattern.permute.xlu0 0
        %1686 = vperm.xlu0 %1685, %v1620
        %v1687 = vpop.permute.xlu0 %1686
        %1690 = vset.pattern.permute.xlu0 0
        %1691 = vperm.xlu0 %1690, %v1622
        %v1692 = vpop.permute.xlu0 %1691
        %1695 = vset.pattern.permute.xlu0 0
        %1696 = vperm.xlu0 %1695, %v1624
        %v1697 = vpop.permute.xlu0 %1696
        %1700 = vset.pattern.permute.xlu0 0
        %1701 = vperm.xlu0 %1700, %v1626
        %v1702 = vpop.permute.xlu0 %1701
        %1705 = vset.pattern.permute.xlu0 0
        %1706 = vperm.xlu0 %1705, %v1628
        %v1707 = vpop.permute.xlu0 %1706
        %v1709 = vmul.f32 %v1632, %v1422
        %v1710 = vmul.f32 %v1632, %v1423
        %v1711 = vmul.f32 %v1637, %v1425
        %v1712 = vmul.f32 %v1637, %v1426
        %v1713 = vmul.f32 %v1642, %v1428
        %v1714 = vmul.f32 %v1642, %v1429
        %v1715 = vmul.f32 %v1647, %v1431
        %v1716 = vmul.f32 %v1647, %v1432
        %v1717 = vmul.f32 %v1652, %v1434
        %v1718 = vmul.f32 %v1652, %v1435
        %v1719 = vmul.f32 %v1657, %v1437
        %v1720 = vmul.f32 %v1657, %v1438
        %v1721 = vmul.f32 %v1662, %v1440
        %v1722 = vmul.f32 %v1662, %v1441
        %v1723 = vmul.f32 %v1667, %v1443
        %v1724 = vmul.f32 %v1667, %v1444
        %v1725 = vmul.f32 %v1672, %v1446
        %v1726 = vmul.f32 %v1672, %v1447
        %v1727 = vmul.f32 %v1677, %v1449
        %v1728 = vmul.f32 %v1677, %v1450
        %v1729 = vmul.f32 %v1682, %v1452
        %v1730 = vmul.f32 %v1682, %v1453
        %v1731 = vmul.f32 %v1687, %v1455
        %v1732 = vmul.f32 %v1687, %v1456
        %v1733 = vmul.f32 %v1692, %v1458
        %v1734 = vmul.f32 %v1692, %v1459
        %v1735 = vmul.f32 %v1697, %v1461
        %v1736 = vmul.f32 %v1697, %v1462
        %v1737 = vmul.f32 %v1702, %v1464
        %v1738 = vmul.f32 %v1702, %v1465
        %v1739 = vmul.f32 %v1707, %v1467
        %v1740 = vmul.f32 %v1707, %v1468
        %v1741 = vpack.c.bf16 %v1711, %v1709
        %v1742 = vpack.c.bf16 %v1712, %v1710
        %v1743 = vpack.c.bf16 %v1715, %v1713
        %v1744 = vpack.c.bf16 %v1716, %v1714
        %v1745 = vpack.c.bf16 %v1719, %v1717
        %v1746 = vpack.c.bf16 %v1720, %v1718
        %v1747 = vpack.c.bf16 %v1723, %v1721
        %v1748 = vpack.c.bf16 %v1724, %v1722
        %v1749 = vpack.c.bf16 %v1727, %v1725
        %v1750 = vpack.c.bf16 %v1728, %v1726
        %v1751 = vpack.c.bf16 %v1731, %v1729
        %v1752 = vpack.c.bf16 %v1732, %v1730
        %v1753 = vpack.c.bf16 %v1735, %v1733
        %v1754 = vpack.c.bf16 %v1736, %v1734
        %v1755 = vpack.c.bf16 %v1739, %v1737
        %v1756 = vpack.c.bf16 %v1740, %v1738
        %v1773 = vunpack.c.l.b16 %v1741
        %v1774 = vunpack.c.l.b16 %v1742
        %v1775 = vunpack.c.h.b16 %v1741
        %v1776 = vunpack.c.h.b16 %v1742
        %v1777 = vunpack.c.l.b16 %v1743
        %v1778 = vunpack.c.l.b16 %v1744
        %v1779 = vunpack.c.h.b16 %v1743
        %v1780 = vunpack.c.h.b16 %v1744
        %v1781 = vunpack.c.l.b16 %v1745
        %v1782 = vunpack.c.l.b16 %v1746
        %v1783 = vunpack.c.h.b16 %v1745
        %v1784 = vunpack.c.h.b16 %v1746
        %v1785 = vunpack.c.l.b16 %v1747
        %v1786 = vunpack.c.l.b16 %v1748
        %v1787 = vunpack.c.h.b16 %v1747
        %v1788 = vunpack.c.h.b16 %v1748
        %v1789 = vunpack.c.l.b16 %v1749
        %v1790 = vunpack.c.l.b16 %v1750
        %v1791 = vunpack.c.h.b16 %v1749
        %v1792 = vunpack.c.h.b16 %v1750
        %v1793 = vunpack.c.l.b16 %v1751
        %v1794 = vunpack.c.l.b16 %v1752
        %v1795 = vunpack.c.h.b16 %v1751
        %v1796 = vunpack.c.h.b16 %v1752
        %v1797 = vunpack.c.l.b16 %v1753
        %v1798 = vunpack.c.l.b16 %v1754
        %v1799 = vunpack.c.h.b16 %v1753
        %v1800 = vunpack.c.h.b16 %v1754
        %v1801 = vunpack.c.l.b16 %v1755
        %v1802 = vunpack.c.l.b16 %v1756
        %v1803 = vunpack.c.h.b16 %v1755
        %v1804 = vunpack.c.h.b16 %v1756
        %v1805 = vpack.c.b16 %v1774, %v1773
        %v1806 = vpack.c.b16 %v1776, %v1775
        %v1807 = vpack.c.b16 %v1778, %v1777
        %v1808 = vpack.c.b16 %v1780, %v1779
        %v1809 = vpack.c.b16 %v1782, %v1781
        %v1810 = vpack.c.b16 %v1784, %v1783
        %v1811 = vpack.c.b16 %v1786, %v1785
        %v1812 = vpack.c.b16 %v1788, %v1787
        %v1813 = vpack.c.b16 %v1790, %v1789
        %v1814 = vpack.c.b16 %v1792, %v1791
        %v1815 = vpack.c.b16 %v1794, %v1793
        %v1816 = vpack.c.b16 %v1796, %v1795
        %v1817 = vpack.c.b16 %v1798, %v1797
        %v1818 = vpack.c.b16 %v1800, %v1799
        %v1819 = vpack.c.b16 %v1802, %v1801
        %v1820 = vpack.c.b16 %v1804, %v1803
        %1837 = vst [vmem:[%s356] sm:$0xff] %v1805
        %1838 = vst [vmem:[%s356 + $0x8] sm:$0xff] %v1806
        %1839 = vst [vmem:[%s356 + $0x10] sm:$0xff] %v1807
        %1840 = vst [vmem:[%s356 + $0x18] sm:$0xff] %v1808
        %1841 = vst [vmem:[%s356 + $0x20] sm:$0xff] %v1809
        %1842 = vst [vmem:[%s356 + $0x28] sm:$0xff] %v1810
        %1843 = vst [vmem:[%s356 + $0x30] sm:$0xff] %v1811
        %1844 = vst [vmem:[%s356 + $0x38] sm:$0xff] %v1812
        %1845 = vst [vmem:[%s356 + $0x40] sm:$0xff] %v1813
        %1846 = vst [vmem:[%s356 + $0x48] sm:$0xff] %v1814
        %1847 = vst [vmem:[%s356 + $0x50] sm:$0xff] %v1815
        %1848 = vst [vmem:[%s356 + $0x58] sm:$0xff] %v1816
        %1849 = vst [vmem:[%s356 + $0x60] sm:$0xff] %v1817
        %1850 = vst [vmem:[%s356 + $0x68] sm:$0xff] %v1818
        %1851 = vst [vmem:[%s356 + $0x70] sm:$0xff] %v1819
        %1852 = vst [vmem:[%s356 + $0x78] sm:$0xff] %v1820
        %s1853 = sand.u32 %s174, 1
        %s1854 = scalar_lea.sflag [#allocation3], %s1853
        %s1855 = sand.u32 %s174, 1
        %s1856 = smul.addr %s1855, 128
        %s1857 = scalar_lea.vmem [#allocation2], %s1856
        %s1858 = sand.u32 %s30, 1
        %s1859 = scalar_lea.sflag [#allocation5], %s1858
        %s1860 = sand.u32 %s200, 1
        %s1861 = smul.addr %s1860, 128
        %s1862 = scalar_lea.vmem [#allocation4], %s1861
        %s1863 = sand.u32 %s30, 1
        %s1864 = scalar_lea.sflag [#allocation5], %s1863
        %s1865 = sand.u32 %s226, 1
        %s1866 = smul.addr %s1865, 128
        %s1867 = scalar_lea.vmem [#allocation6], %s1866
        %s1868 = sand.u32 %s252, 1
        %s1869 = scalar_lea.sflag [#allocation8], %s1868
        %s1870 = sand.u32 %s252, 1
        %s1871 = smul.addr %s1870, 64
        %s1872 = scalar_lea.vmem [#allocation7], %s1871
        // Predicated region
        $region45: #{tpu_custom_call.1} parent=43 // pred_check
          %p1873 = pneg %p184
        $region46: #{tpu_custom_call.1} parent=43 // pred_check_branch
          %1875 = sbr.rel (%p1873) target = $region48
        $region47: #{tpu_custom_call.1} parent=43 // pred_region
          %s1876 = smul.u32 16, %s30
          %s1878 = ssub.s32 2048, 2048
          %1879 = vsyncadd %s1854, %s1878
          %s1880 = smul.addr %s1876, 2
          %s1881 = smul.addr %s1880, 64
          %s1882 = scalar_lea.hbm %s6, %s1881
          %s1883 = sshll.u32 %s1857, 4
          %s1884 = int_to_ptr.vmem [resolvable:$true] %s1883
          %1889 = dma.vmem_to_hbm [thread:$0]  %s1884, 2048, %s1882, %s1854, 128, 128, 8
        $region48: #{tpu_custom_call.1} parent=43 // pred_fallthru
          _
        // Predicated region
        $region49: #{tpu_custom_call.1} parent=43 // pred_check
          %p1890 = pneg %p210
        $region50: #{tpu_custom_call.1} parent=43 // pred_check_branch
          %1892 = sbr.rel (%p1890) target = $region52
        $region51: #{tpu_custom_call.1} parent=43 // pred_region
          %s1893 = smul.u32 16, %s30
          %s1895 = ssub.s32 2048, 2048
          %1896 = vsyncadd %s1859, %s1895
          %s1897 = smul.addr %s1893, 2
          %s1898 = smul.addr %s1897, 64
          %s1899 = scalar_lea.hbm %s7, %s1898
          %s1900 = sshll.u32 %s1862, 4
          %s1901 = int_to_ptr.vmem [resolvable:$true] %s1900
          %1906 = dma.vmem_to_hbm [thread:$0]  %s1901, 2048, %s1899, %s1859, 128, 128, 8
        $region52: #{tpu_custom_call.1} parent=43 // pred_fallthru
          _
        // Predicated region
        $region53: #{tpu_custom_call.1} parent=43 // pred_check
          %p1907 = pneg %p236
        $region54: #{tpu_custom_call.1} parent=43 // pred_check_branch
          %1909 = sbr.rel (%p1907) target = $region56
        $region55: #{tpu_custom_call.1} parent=43 // pred_region
          %s1910 = smul.u32 16, %s30
          %s1912 = ssub.s32 2048, 2048
          %1913 = vsyncadd %s1864, %s1912
          %s1914 = smul.addr %s1910, 2
          %s1915 = smul.addr %s1914, 64
          %s1916 = scalar_lea.hbm %s8, %s1915
          %s1917 = sshll.u32 %s1867, 4
          %s1918 = int_to_ptr.vmem [resolvable:$true] %s1917
          %1923 = dma.vmem_to_hbm [thread:$0]  %s1918, 2048, %s1916, %s1864, 128, 128, 8
        $region56: #{tpu_custom_call.1} parent=43 // pred_fallthru
          _
        // Predicated region
        $region57: #{tpu_custom_call.1} parent=43 // pred_check
          %p1924 = pneg %p262
        $region58: #{tpu_custom_call.1} parent=43 // pred_check_branch
          %1926 = sbr.rel (%p1924) target = $region60
        $region59: #{tpu_custom_call.1} parent=43 // pred_region
          %s1927 = smul.u32 16, %s30
          %s1929 = ssub.s32 1024, 1024
          %1930 = vsyncadd %s1869, %s1929
          %s1931 = smul.addr %s1927, 64
          %s1932 = scalar_lea.hbm %s9, %s1931
          %s1933 = sshll.u32 %s1872, 4
          %s1934 = int_to_ptr.vmem [resolvable:$true] %s1933
          %1939 = dma.vmem_to_hbm [thread:$0]  %s1934, 1024, %s1932, %s1869, 64, 64, 4
        $region60: #{tpu_custom_call.1} parent=43 // pred_fallthru
          _
      $region44: #{tpu_custom_call.1} parent=5 // pred_fallthru
        _
      %p1940 = scmp.le.s32.totalorder 2, %s25
      // Predicated region
      $region61: #{tpu_custom_call.1} parent=5 // pred_check
        %p1941 = pneg %p1940
      $region62: #{tpu_custom_call.1} parent=5 // pred_check_branch
        %1943 = sbr.rel (%p1941) target = $region64
      $region63: #{tpu_custom_call.1} parent=5 // pred_region
        %s1944 = ssub.s32 %s25, 2
        // Predicated region
        $region65: #{tpu_custom_call.1} parent=63 // pred_check
          %p1945 = pneg %p190
        $region66: #{tpu_custom_call.1} parent=63 // pred_check_branch
          %1947 = sbr.rel (%p1945) target = $region68
        $region67: #{tpu_custom_call.1} parent=63 // pred_region
          %s1948 = sand.u32 %s175, 1
          %s1949 = scalar_lea.sflag [#allocation3], %s1948
          %s1950 = sand.u32 %s175, 1
          %s1951 = smul.addr %s1950, 128
          %s1952 = scalar_lea.vmem [#allocation2], %s1951
          %1953 = dma.done %s1949, 2048
        $region68: #{tpu_custom_call.1} parent=63 // pred_fallthru
          _
        // Predicated region
        $region69: #{tpu_custom_call.1} parent=63 // pred_check
          %p1954 = pneg %p216
        $region70: #{tpu_custom_call.1} parent=63 // pred_check_branch
          %1956 = sbr.rel (%p1954) target = $region72
        $region71: #{tpu_custom_call.1} parent=63 // pred_region
          %s1957 = sand.u32 %s31, 1
          %s1958 = scalar_lea.sflag [#allocation5], %s1957
          %s1959 = sand.u32 %s201, 1
          %s1960 = smul.addr %s1959, 128
          %s1961 = scalar_lea.vmem [#allocation4], %s1960
          %1962 = dma.done %s1958, 2048
        $region72: #{tpu_custom_call.1} parent=63 // pred_fallthru
          _
        // Predicated region
        $region73: #{tpu_custom_call.1} parent=63 // pred_check
          %p1963 = pneg %p242
        $region74: #{tpu_custom_call.1} parent=63 // pred_check_branch
          %1965 = sbr.rel (%p1963) target = $region76
        $region75: #{tpu_custom_call.1} parent=63 // pred_region
          %s1966 = sand.u32 %s31, 1
          %s1967 = scalar_lea.sflag [#allocation5], %s1966
          %s1968 = sand.u32 %s227, 1
          %s1969 = smul.addr %s1968, 128
          %s1970 = scalar_lea.vmem [#allocation6], %s1969
          %1971 = dma.done %s1967, 2048
        $region76: #{tpu_custom_call.1} parent=63 // pred_fallthru
          _
        // Predicated region
        $region77: #{tpu_custom_call.1} parent=63 // pred_check
          %p1972 = pneg %p268
        $region78: #{tpu_custom_call.1} parent=63 // pred_check_branch
          %1974 = sbr.rel (%p1972) target = $region80
        $region79: #{tpu_custom_call.1} parent=63 // pred_region
          %s1975 = sand.u32 %s253, 1
          %s1976 = scalar_lea.sflag [#allocation8], %s1975
          %s1977 = sand.u32 %s253, 1
          %s1978 = smul.addr %s1977, 64
          %s1979 = scalar_lea.vmem [#allocation7], %s1978
          %1980 = dma.done %s1976, 1024
        $region80: #{tpu_custom_call.1} parent=63 // pred_fallthru
          _
      $region64: #{tpu_custom_call.1} parent=5 // pred_fallthru
        _
    $region6: #{tpu_custom_call.1} parent=1 // loop_footer
      %s29 = sadd.s32 1, %s25
    $region7: #{tpu_custom_call.1} parent=1 // loop_footer_branch
      %24 = sbr.rel target = $region3
    $region8: #{tpu_custom_call.1} parent=1 // loop_exit
      _
    %1981 = vsyncpa [#allocation3], 1
    %s1982 = scalar_lea.sflag [#allocation3], 1
    %1983 = vsyncpa %s1982, 1
    %1984 = vsyncpa [#allocation5], 1
    %s1985 = scalar_lea.sflag [#allocation5], 1
    %1986 = vsyncpa %s1985, 1
    %1987 = vsyncpa [#allocation8], 1
    %s1988 = scalar_lea.sflag [#allocation8], 1
    %1989 = vsyncpa %s1988, 1

</llo_original>
